<compile_context>
chip_gen: v5e
topology: v5e:2x2
jax: 0.10.0
libtpu: 0.0.40
codegen_flags: <defaults>
</compile_context>

<pallas_src>
import functools

import jax
import jax.numpy as jnp
from jax import lax
from jax.experimental import pallas as pl
from jax.experimental.pallas import tpu as pltpu


# ----------------------------- config --------------------------------------

class Config:
    vocab_size = 100
    hidden = 32
    num_heads = 4
    num_layers = 2
    intermediate = 64
    max_position = 16
    type_vocab = 2
    num_classes = 5
    ln_eps = 1e-12


# ----------------------------- kernel helpers -------------------------------

def _gelu(x):
    # TODO(synk): reference BERT uses exact erf-GELU; tanh approximation used
    # here for robust Mosaic lowering (max abs deviation ~1e-3 of activation).
    return 0.5 * x * (1.0 + jnp.tanh(0.7978845608028654 * (x + 0.044715 * x * x * x)))


def _layernorm(x, g, b, eps):
    mu = jnp.mean(x, axis=-1, keepdims=True)
    d = x - mu
    var = jnp.mean(d * d, axis=-1, keepdims=True)
    return d * jax.lax.rsqrt(var + eps) * g + b


# ----------------------------- fused kernel ---------------------------------

def fused_bert_kernel(
    ids_ref, mask_ref, wemb_ref, pt_ref, dvec_ref,
    wqkv_ref, bqkv_ref, wo_ref, ff1w_ref, ff1b_ref, ff2w_ref, cls_ref,
    logits_ref,
    *, num_layers, heads, eps,
):
    S, D = pt_ref.shape
    H = heads
    Dh = D // H
    Vpad = wemb_ref.shape[0]

    # ---- embedding gather fused in-kernel: one-hot (S, Vpad) x table matmul ----
    iota = lax.broadcasted_iota(jnp.int32, (S, Vpad), 1)
    onehot = (iota == ids_ref[...]).astype(jnp.float32)            # (S, Vpad)
    word = jnp.dot(onehot, wemb_ref[...], preferred_element_type=jnp.float32)
    # + position + token-type(segment 0) embeddings, then embedding LayerNorm.
    h = _layernorm(word + pt_ref[...], dvec_ref[0], dvec_ref[1], eps)

    # ---- additive attention-mask bias computed in-kernel ----
    bias = (1.0 - mask_ref[...]) * -10000.0                        # (1, 1, S)

    # ---- encoder layers, unrolled; all weights stay VMEM-resident ----
    for l in range(num_layers):
        base = 2 + 6 * l

        # Fused QKV projection as ONE batched dot_general; q/k/v and heads are
        # leading axes of the result (no lane slicing of activations).
        hb = jnp.broadcast_to(h[None], (3 * H, S, D))
        qkv = jnp.einsum("nsd,ndk->nsk", hb, wqkv_ref[l],
                         preferred_element_type=jnp.float32) + bqkv_ref[l]
        q, k, v = qkv[:H], qkv[H:2 * H], qkv[2 * H:]                # (H, S, Dh) views

        # Batched attention over all heads at once (scale folded into Wq/bq).
        s = jnp.einsum("hsd,htd->hst", q, k,
                       preferred_element_type=jnp.float32) + bias   # (H, S, S)
        s = s - jnp.max(s, axis=-1, keepdims=True)
        p = jnp.exp(s)
        p = p / jnp.sum(p, axis=-1, keepdims=True)                  # exact normalization
        ctx = jnp.einsum("hst,htd->hsd", p, v,
                         preferred_element_type=jnp.float32)        # (H, S, Dh)

        # Per-head output projection + head merge (sum over leading axis).
        proj = jnp.einsum("hsd,hdk->hsk", ctx, wo_ref[l],
                          preferred_element_type=jnp.float32)       # (H, S, D)
        attn = jnp.sum(proj, axis=0) + dvec_ref[base + 0]           # (S, D)
        h = _layernorm(attn + h, dvec_ref[base + 1], dvec_ref[base + 2], eps)

        # Feed-forward: dense + GELU, dense, residual + LayerNorm.
        inter = _gelu(jnp.dot(h, ff1w_ref[l], preferred_element_type=jnp.float32)
                      + ff1b_ref[l])
        ff = (jnp.dot(inter, ff2w_ref[l], preferred_element_type=jnp.float32)
              + dvec_ref[base + 3])
        h = _layernorm(ff + h, dvec_ref[base + 4], dvec_ref[base + 5], eps)

    # ---- token classification head, written narrow (no external slice) ----
    cw = cls_ref[0:D, :]                                            # (D, C)
    cb = cls_ref[D:D + 1, :]                                        # (1, C)
    logits = jnp.dot(h, cw, preferred_element_type=jnp.float32) + cb
    logits_ref[0] = logits.astype(logits_ref.dtype)


# ----------------------------- params ----------------------------------------

def init_params(key, cfg):
    def nrm(k, shape):
        return 0.02 * jax.random.normal(k, shape, dtype=jnp.float32)

    keys = iter(jax.random.split(key, 8 + 16 * cfg.num_layers))
    p = {
        "word_emb": nrm(next(keys), (cfg.vocab_size, cfg.hidden)),
        "pos_emb": nrm(next(keys), (cfg.max_position, cfg.hidden)),
        "type_emb": nrm(next(keys), (cfg.type_vocab, cfg.hidden)),
        "emb_ln_g": jnp.ones((cfg.hidden,), jnp.float32),
        "emb_ln_b": jnp.zeros((cfg.hidden,), jnp.float32),
        "cls_w": nrm(next(keys), (cfg.hidden, cfg.num_classes)),
        "cls_b": jnp.zeros((cfg.num_classes,), jnp.float32),
        "layers": [],
    }
    for _ in range(cfg.num_layers):
        layer = {
            "q_w": nrm(next(keys), (cfg.hidden, cfg.hidden)),
            "q_b": jnp.zeros((cfg.hidden,), jnp.float32),
            "k_w": nrm(next(keys), (cfg.hidden, cfg.hidden)),
            "k_b": jnp.zeros((cfg.hidden,), jnp.float32),
            "v_w": nrm(next(keys), (cfg.hidden, cfg.hidden)),
            "v_b": jnp.zeros((cfg.hidden,), jnp.float32),
            "ao_w": nrm(next(keys), (cfg.hidden, cfg.hidden)),
            "ao_b": jnp.zeros((cfg.hidden,), jnp.float32),
            "ao_ln_g": jnp.ones((cfg.hidden,), jnp.float32),
            "ao_ln_b": jnp.zeros((cfg.hidden,), jnp.float32),
            "ff1_w": nrm(next(keys), (cfg.hidden, cfg.intermediate)),
            "ff1_b": jnp.zeros((cfg.intermediate,), jnp.float32),
            "ff2_w": nrm(next(keys), (cfg.intermediate, cfg.hidden)),
            "ff2_b": jnp.zeros((cfg.hidden,), jnp.float32),
            "out_ln_g": jnp.ones((cfg.hidden,), jnp.float32),
            "out_ln_b": jnp.zeros((cfg.hidden,), jnp.float32),
        }
        p["layers"].append(layer)
    return p


def prepare_params(params, cfg):
    """One-time host-side re-layout of weights into kernel-friendly shapes."""
    D, H, L = cfg.hidden, cfg.num_heads, cfg.num_layers
    Dh = D // H
    V = cfg.vocab_size
    Vpad = ((V + 127) // 128) * 128
    scale = 1.0 / (Dh ** 0.5)
    ls = params["layers"]

    def heads_w(w):   # (D, H*Dh) columns -> (H, D, Dh)
        return w.reshape(D, H, Dh).transpose(1, 0, 2)

    def heads_b(b):   # (H*Dh,) -> (H, 1, Dh)
        return b.reshape(H, Dh)[:, None, :]

    wqkv = jnp.stack([
        jnp.concatenate([heads_w(l["q_w"] * scale),
                         heads_w(l["k_w"]),
                         heads_w(l["v_w"])], axis=0) for l in ls])      # (L, 3H, D, Dh)
    bqkv = jnp.stack([
        jnp.concatenate([heads_b(l["q_b"] * scale),
                         heads_b(l["k_b"]),
                         heads_b(l["v_b"])], axis=0) for l in ls])      # (L, 3H, 1, Dh)
    wo = jnp.stack([l["ao_w"].reshape(H, Dh, D) for l in ls])           # (L, H, Dh, D)

    # Consolidated D-width LayerNorm / bias rows (fewer DMA descriptors).
    dvec_rows = [params["emb_ln_g"], params["emb_ln_b"]]
    for l in ls:
        dvec_rows += [l["ao_b"], l["ao_ln_g"], l["ao_ln_b"],
                      l["ff2_b"], l["out_ln_g"], l["out_ln_b"]]
    dvecs = jnp.stack(dvec_rows)[:, None, :]                            # (2+6L, 1, D)

    ff1_w = jnp.stack([l["ff1_w"] for l in ls])                         # (L, D, I)
    ff1_b = jnp.stack([l["ff1_b"][None, :] for l in ls])                # (L, 1, I)
    ff2_w = jnp.stack([l["ff2_w"] for l in ls])                         # (L, I, D)

    word_emb = jnp.zeros((Vpad, D), jnp.float32).at[:V].set(params["word_emb"])
    # token_type_ids hard-coded to segment 0 (matches the wrapped model usage).
    pos_type = params["pos_emb"] + params["type_emb"][0][None, :]       # (P, D)
    cls_wb = jnp.concatenate([params["cls_w"], params["cls_b"][None, :]], axis=0)

    return dict(word_emb=word_emb, pos_type=pos_type, dvecs=dvecs,
                wqkv=wqkv, bqkv=bqkv, wo=wo,
                ff1_w=ff1_w, ff1_b=ff1_b, ff2_w=ff2_w, cls_wb=cls_wb)


# ----------------------------- forward ----------------------------------------

def bert_token_classifier_forward(prepared, input_ids, attention_mask, cfg):
    B, S = input_ids.shape
    D, H, L, C = cfg.hidden, cfg.num_heads, cfg.num_layers, cfg.num_classes
    assert S % 8 == 0 and S <= cfg.max_position, "seq len must be a multiple of 8"

    ids = input_ids.reshape(B * S, 1).astype(jnp.int32)
    mask3 = attention_mask.astype(jnp.float32).reshape(B, 1, S)

    kernel = functools.partial(
        fused_bert_kernel, num_layers=L, heads=H, eps=cfg.ln_eps)

    def full(a):
        return pl.BlockSpec(a.shape, lambda b, _nd=a.ndim: (0,) * _nd)

    in_specs = [
        pl.BlockSpec((S, 1), lambda b: (b, 0)),          # ids (per batch element)
        pl.BlockSpec((1, 1, S), lambda b: (b, 0, 0)),    # attention mask
        full(prepared["word_emb"]),                      # (Vpad, D)
        pl.BlockSpec((S, D), lambda b: (0, 0)),          # pos+type table (first S rows)
        full(prepared["dvecs"]),
        full(prepared["wqkv"]),
        full(prepared["bqkv"]),
        full(prepared["wo"]),
        full(prepared["ff1_w"]),
        full(prepared["ff1_b"]),
        full(prepared["ff2_w"]),
        full(prepared["cls_wb"]),
    ]
    out_spec = pl.BlockSpec((1, S, C), lambda b: (b, 0, 0))

    logits = pl.pallas_call(
        kernel,
        out_shape=jax.ShapeDtypeStruct((B, S, C), jnp.float32),
        grid=(B,),
        in_specs=in_specs,
        out_specs=out_spec,
        compiler_params=pltpu.CompilerParams(
            dimension_semantics=("parallel",)),          # v7x: batch across both TCs
    )(ids, mask3, prepared["word_emb"], prepared["pos_type"], prepared["dvecs"],
      prepared["wqkv"], prepared["bqkv"], prepared["wo"],
      prepared["ff1_w"], prepared["ff1_b"], prepared["ff2_w"], prepared["cls_wb"])

    return logits


# ----------------------------- main ------------------------------------------

if __name__ == "__main__":
    cfg = Config()
    B, S = 2, 8

    key = jax.random.PRNGKey(0)
    k_params, k_ids = jax.random.split(key)

    params = init_params(k_params, cfg)
    prepared = prepare_params(params, cfg)   # one-time weight re-layout (outside jit)

    input_ids = jax.random.randint(k_ids, (B, S), 0, cfg.vocab_size, dtype=jnp.int32)
    # attention mask: last two tokens of batch element 1 are padding
    attention_mask = jnp.array(
        [[1, 1, 1, 1, 1, 1, 1, 1],
         [1, 1, 1, 1, 1, 1, 0, 0]], dtype=jnp.float32)

    fwd = jax.jit(functools.partial(bert_token_classifier_forward, cfg=cfg))
    logits = fwd(prepared, input_ids, attention_mask)
    jax.block_until_ready(logits)

    assert logits.shape == (B, S, cfg.num_classes)
    assert logits.dtype == jnp.float32
    print("KERNEL_OK")
</pallas_src>

<mosaic_0001>
module attributes {stable_mosaic.version = 11 : i64} {
  func.func @fused_bert_kernel(%arg0: i32, %arg1: memref<8x1xi32, #tpu.memory_space<vmem>>, %arg2: memref<1x1x8xf32, #tpu.memory_space<vmem>>, %arg3: memref<128x32xf32, #tpu.memory_space<vmem>>, %arg4: memref<8x32xf32, #tpu.memory_space<vmem>>, %arg5: memref<14x1x32xf32, #tpu.memory_space<vmem>>, %arg6: memref<2x12x32x8xf32, #tpu.memory_space<vmem>>, %arg7: memref<2x12x1x8xf32, #tpu.memory_space<vmem>>, %arg8: memref<2x4x8x32xf32, #tpu.memory_space<vmem>>, %arg9: memref<2x32x64xf32, #tpu.memory_space<vmem>>, %arg10: memref<2x1x64xf32, #tpu.memory_space<vmem>>, %arg11: memref<2x64x32xf32, #tpu.memory_space<vmem>>, %arg12: memref<33x5xf32, #tpu.memory_space<vmem>>, %arg13: memref<1x8x5xf32, #tpu.memory_space<vmem>>) attributes {dimension_semantics = [#tpu.dimension_semantics<parallel>], iteration_bounds = array<i64: 2>, scalar_prefetch = 0 : i64, scratch_operands = 0 : i64, tpu.core_type = #tpu.core_type<tc>, window_params = [{transform_indices = @transform_0, window_bounds = array<i64: 8, 1>}, {transform_indices = @transform_1, window_bounds = array<i64: 1, 1, 8>}, {pipeline_mode = #tpu.pipeline_mode<synchronous>, transform_indices = @transform_2, window_bounds = array<i64: 128, 32>}, {transform_indices = @transform_3, window_bounds = array<i64: 8, 32>}, {pipeline_mode = #tpu.pipeline_mode<synchronous>, transform_indices = @transform_4, window_bounds = array<i64: 14, 1, 32>}, {pipeline_mode = #tpu.pipeline_mode<synchronous>, transform_indices = @transform_5, window_bounds = array<i64: 2, 12, 32, 8>}, {pipeline_mode = #tpu.pipeline_mode<synchronous>, transform_indices = @transform_6, window_bounds = array<i64: 2, 12, 1, 8>}, {pipeline_mode = #tpu.pipeline_mode<synchronous>, transform_indices = @transform_7, window_bounds = array<i64: 2, 4, 8, 32>}, {pipeline_mode = #tpu.pipeline_mode<synchronous>, transform_indices = @transform_8, window_bounds = array<i64: 2, 32, 64>}, {pipeline_mode = #tpu.pipeline_mode<synchronous>, transform_indices = @transform_9, window_bounds = array<i64: 2, 1, 64>}, {pipeline_mode = #tpu.pipeline_mode<synchronous>, transform_indices = @transform_10, window_bounds = array<i64: 2, 64, 32>}, {pipeline_mode = #tpu.pipeline_mode<synchronous>, transform_indices = @transform_11, window_bounds = array<i64: 33, 5>}, {transform_indices = @transform_12, window_bounds = array<i64: 1, 8, 5>}]} {
    %0 = tpu.iota {dimensions = array<i32: 1>} : vector<8x128xi32>
    %c0 = arith.constant 0 : index
    %c0_0 = arith.constant 0 : index
    %1 = vector.load %arg1[%c0, %c0_0] : memref<8x1xi32, #tpu.memory_space<vmem>>, vector<8x1xi32>
    %2 = vector.broadcast %1 : vector<8x1xi32> to vector<8x128xi32>
    %3 = arith.cmpi eq, %0, %2 : vector<8x128xi32>
    %4 = arith.extui %3 : vector<8x128xi1> to vector<8x128xi32>
    %5 = arith.sitofp %4 : vector<8x128xi32> to vector<8x128xf32>
    %c0_1 = arith.constant 0 : index
    %c0_2 = arith.constant 0 : index
    %6 = vector.load %arg3[%c0_1, %c0_2] : memref<128x32xf32, #tpu.memory_space<vmem>>, vector<128x32xf32>
    %cst = arith.constant dense<0.000000e+00> : vector<8x32xf32>
    %7 = tpu.matmul %5, %6, %cst {dimension_numbers = #tpu.dot_dimension_numbers<[1], [0], [0], [1], [0, 0, 1, 1], [], []>} : vector<8x128xf32>, vector<128x32xf32>, vector<8x32xf32> -> vector<8x32xf32>
    %c0_3 = arith.constant 0 : index
    %c0_4 = arith.constant 0 : index
    %8 = vector.load %arg4[%c0_3, %c0_4] : memref<8x32xf32, #tpu.memory_space<vmem>>, vector<8x32xf32>
    %9 = arith.addf %7, %8 : vector<8x32xf32>
    %c0_5 = arith.constant 0 : index
    %c0_6 = arith.constant 0 : index
    %c0_7 = arith.constant 0 : index
    %10 = vector.load %arg5[%c0_5, %c0_6, %c0_7] : memref<14x1x32xf32, #tpu.memory_space<vmem>>, vector<1x1x32xf32>
    %11 = vector.shape_cast %10 : vector<1x1x32xf32> to vector<1x32xf32>
    %c1 = arith.constant 1 : index
    %c0_8 = arith.constant 0 : index
    %c0_9 = arith.constant 0 : index
    %12 = vector.load %arg5[%c1, %c0_8, %c0_9] : memref<14x1x32xf32, #tpu.memory_space<vmem>>, vector<1x1x32xf32>
    %13 = vector.shape_cast %12 : vector<1x1x32xf32> to vector<1x32xf32>
    %cst_10 = arith.constant dense<0.000000e+00> : vector<8xf32>
    %14 = vector.multi_reduction <add>, %9, %cst_10 [1] : vector<8x32xf32> to vector<8xf32>
    %15 = vector.shape_cast %14 : vector<8xf32> to vector<8x1xf32>
    %cst_11 = arith.constant 3.200000e+01 : f32
    %16 = vector.broadcast %cst_11 : f32 to vector<8x1xf32>
    %17 = arith.divf %15, %16 : vector<8x1xf32>
    %18 = vector.broadcast %17 : vector<8x1xf32> to vector<8x32xf32>
    %19 = arith.subf %9, %18 : vector<8x32xf32>
    %20 = arith.mulf %19, %19 : vector<8x32xf32>
    %cst_12 = arith.constant dense<0.000000e+00> : vector<8xf32>
    %21 = vector.multi_reduction <add>, %20, %cst_12 [1] : vector<8x32xf32> to vector<8xf32>
    %22 = vector.shape_cast %21 : vector<8xf32> to vector<8x1xf32>
    %cst_13 = arith.constant 3.200000e+01 : f32
    %23 = vector.broadcast %cst_13 : f32 to vector<8x1xf32>
    %24 = arith.divf %22, %23 : vector<8x1xf32>
    %cst_14 = arith.constant 9.99999996E-13 : f32
    %25 = vector.broadcast %cst_14 : f32 to vector<8x1xf32>
    %26 = arith.addf %24, %25 : vector<8x1xf32>
    %27 = math.rsqrt %26 : vector<8x1xf32>
    %28 = vector.broadcast %27 : vector<8x1xf32> to vector<8x32xf32>
    %29 = arith.mulf %19, %28 : vector<8x32xf32>
    %30 = vector.broadcast %11 : vector<1x32xf32> to vector<8x32xf32>
    %31 = arith.mulf %29, %30 : vector<8x32xf32>
    %32 = vector.broadcast %13 : vector<1x32xf32> to vector<8x32xf32>
    %33 = arith.addf %31, %32 : vector<8x32xf32>
    %c0_15 = arith.constant 0 : index
    %c0_16 = arith.constant 0 : index
    %c0_17 = arith.constant 0 : index
    %34 = vector.load %arg2[%c0_15, %c0_16, %c0_17] : memref<1x1x8xf32, #tpu.memory_space<vmem>>, vector<1x1x8xf32>
    %cst_18 = arith.constant 1.000000e+00 : f32
    %35 = vector.broadcast %cst_18 : f32 to vector<1x1x8xf32>
    %36 = arith.subf %35, %34 : vector<1x1x8xf32>
    %cst_19 = arith.constant -1.000000e+04 : f32
    %37 = vector.broadcast %cst_19 : f32 to vector<1x1x8xf32>
    %38 = arith.mulf %36, %37 : vector<1x1x8xf32>
    %39 = vector.shape_cast %33 : vector<8x32xf32> to vector<1x8x32xf32>
    %40 = vector.shape_cast %39 : vector<1x8x32xf32> to vector<1x8x32xf32>
    %41 = vector.broadcast %40 : vector<1x8x32xf32> to vector<12x8x32xf32>
    %c0_20 = arith.constant 0 : index
    %c0_21 = arith.constant 0 : index
    %c0_22 = arith.constant 0 : index
    %c0_23 = arith.constant 0 : index
    %42 = vector.load %arg6[%c0_20, %c0_21, %c0_22, %c0_23] : memref<2x12x32x8xf32, #tpu.memory_space<vmem>>, vector<1x12x32x8xf32>
    %43 = vector.shape_cast %42 : vector<1x12x32x8xf32> to vector<12x32x8xf32>
    "tpu.trace_start"() <{level = 10 : i32, message = "nsd,ndk->nsk"}> : () -> ()
    %cst_24 = arith.constant dense<0.000000e+00> : vector<12x8x8xf32>
    %44 = tpu.matmul %41, %43, %cst_24 {dimension_numbers = #tpu.dot_dimension_numbers<[2], [1], [1], [2], [0, 0, 0, 1, 1, 2], [0], [0]>} : vector<12x8x32xf32>, vector<12x32x8xf32>, vector<12x8x8xf32> -> vector<12x8x8xf32>
    "tpu.trace_stop"() : () -> ()
    %c0_25 = arith.constant 0 : index
    %c0_26 = arith.constant 0 : index
    %c0_27 = arith.constant 0 : index
    %c0_28 = arith.constant 0 : index
    %45 = vector.load %arg7[%c0_25, %c0_26, %c0_27, %c0_28] : memref<2x12x1x8xf32, #tpu.memory_space<vmem>>, vector<1x12x1x8xf32>
    %46 = vector.shape_cast %45 : vector<1x12x1x8xf32> to vector<12x1x8xf32>
    %47 = vector.broadcast %46 : vector<12x1x8xf32> to vector<12x8x8xf32>
    %48 = arith.addf %44, %47 : vector<12x8x8xf32>
    %49 = vector.extract_strided_slice %48 {offsets = [0, 0, 0], sizes = [4, 8, 8], strides = [1, 1, 1]} : vector<12x8x8xf32> to vector<4x8x8xf32>
    %50 = vector.extract_strided_slice %48 {offsets = [4, 0, 0], sizes = [4, 8, 8], strides = [1, 1, 1]} : vector<12x8x8xf32> to vector<4x8x8xf32>
    %51 = vector.extract_strided_slice %48 {offsets = [8, 0, 0], sizes = [4, 8, 8], strides = [1, 1, 1]} : vector<12x8x8xf32> to vector<4x8x8xf32>
    "tpu.trace_start"() <{level = 10 : i32, message = "hsd,htd->hst"}> : () -> ()
    %cst_29 = arith.constant dense<0.000000e+00> : vector<4x8x8xf32>
    %52 = tpu.matmul %49, %50, %cst_29 {dimension_numbers = #tpu.dot_dimension_numbers<[2], [2], [1], [1], [0, 0, 0, 1, 1, 1], [0], [0]>} : vector<4x8x8xf32>, vector<4x8x8xf32>, vector<4x8x8xf32> -> vector<4x8x8xf32>
    "tpu.trace_stop"() : () -> ()
    %53 = vector.broadcast %38 : vector<1x1x8xf32> to vector<4x8x8xf32>
    %54 = arith.addf %52, %53 : vector<4x8x8xf32>
    %cst_30 = arith.constant dense<0xFF800000> : vector<4x8xf32>
    %55 = vector.multi_reduction <maximumf>, %54, %cst_30 [2] : vector<4x8x8xf32> to vector<4x8xf32>
    %56 = vector.shape_cast %55 : vector<4x8xf32> to vector<4x8x1xf32>
    %57 = vector.broadcast %56 : vector<4x8x1xf32> to vector<4x8x8xf32>
    %58 = arith.subf %54, %57 : vector<4x8x8xf32>
    %59 = math.exp %58 : vector<4x8x8xf32>
    %cst_31 = arith.constant dense<0.000000e+00> : vector<4x8xf32>
    %60 = vector.multi_reduction <add>, %59, %cst_31 [2] : vector<4x8x8xf32> to vector<4x8xf32>
    %61 = vector.shape_cast %60 : vector<4x8xf32> to vector<4x8x1xf32>
    %62 = vector.broadcast %61 : vector<4x8x1xf32> to vector<4x8x8xf32>
    %63 = arith.divf %59, %62 : vector<4x8x8xf32>
    "tpu.trace_start"() <{level = 10 : i32, message = "hst,htd->hsd"}> : () -> ()
    %cst_32 = arith.constant dense<0.000000e+00> : vector<4x8x8xf32>
    %64 = tpu.matmul %63, %51, %cst_32 {dimension_numbers = #tpu.dot_dimension_numbers<[2], [1], [1], [2], [0, 0, 0, 1, 1, 2], [0], [0]>} : vector<4x8x8xf32>, vector<4x8x8xf32>, vector<4x8x8xf32> -> vector<4x8x8xf32>
    "tpu.trace_stop"() : () -> ()
    %c0_33 = arith.constant 0 : index
    %c0_34 = arith.constant 0 : index
    %c0_35 = arith.constant 0 : index
    %c0_36 = arith.constant 0 : index
    %65 = vector.load %arg8[%c0_33, %c0_34, %c0_35, %c0_36] : memref<2x4x8x32xf32, #tpu.memory_space<vmem>>, vector<1x4x8x32xf32>
    %66 = vector.shape_cast %65 : vector<1x4x8x32xf32> to vector<4x8x32xf32>
    "tpu.trace_start"() <{level = 10 : i32, message = "hsd,hdk->hsk"}> : () -> ()
    %cst_37 = arith.constant dense<0.000000e+00> : vector<4x8x32xf32>
    %67 = tpu.matmul %64, %66, %cst_37 {dimension_numbers = #tpu.dot_dimension_numbers<[2], [1], [1], [2], [0, 0, 0, 1, 1, 2], [0], [0]>} : vector<4x8x8xf32>, vector<4x8x32xf32>, vector<4x8x32xf32> -> vector<4x8x32xf32>
    "tpu.trace_stop"() : () -> ()
    %cst_38 = arith.constant dense<0.000000e+00> : vector<8x32xf32>
    %68 = vector.multi_reduction <add>, %67, %cst_38 [0] : vector<4x8x32xf32> to vector<8x32xf32>
    %c2 = arith.constant 2 : index
    %c0_39 = arith.constant 0 : index
    %c0_40 = arith.constant 0 : index
    %69 = vector.load %arg5[%c2, %c0_39, %c0_40] : memref<14x1x32xf32, #tpu.memory_space<vmem>>, vector<1x1x32xf32>
    %70 = vector.shape_cast %69 : vector<1x1x32xf32> to vector<1x32xf32>
    %71 = vector.broadcast %70 : vector<1x32xf32> to vector<8x32xf32>
    %72 = arith.addf %68, %71 : vector<8x32xf32>
    %73 = arith.addf %72, %33 : vector<8x32xf32>
    %c3 = arith.constant 3 : index
    %c0_41 = arith.constant 0 : index
    %c0_42 = arith.constant 0 : index
    %74 = vector.load %arg5[%c3, %c0_41, %c0_42] : memref<14x1x32xf32, #tpu.memory_space<vmem>>, vector<1x1x32xf32>
    %75 = vector.shape_cast %74 : vector<1x1x32xf32> to vector<1x32xf32>
    %c4 = arith.constant 4 : index
    %c0_43 = arith.constant 0 : index
    %c0_44 = arith.constant 0 : index
    %76 = vector.load %arg5[%c4, %c0_43, %c0_44] : memref<14x1x32xf32, #tpu.memory_space<vmem>>, vector<1x1x32xf32>
    %77 = vector.shape_cast %76 : vector<1x1x32xf32> to vector<1x32xf32>
    %cst_45 = arith.constant dense<0.000000e+00> : vector<8xf32>
    %78 = vector.multi_reduction <add>, %73, %cst_45 [1] : vector<8x32xf32> to vector<8xf32>
    %79 = vector.shape_cast %78 : vector<8xf32> to vector<8x1xf32>
    %cst_46 = arith.constant 3.200000e+01 : f32
    %80 = vector.broadcast %cst_46 : f32 to vector<8x1xf32>
    %81 = arith.divf %79, %80 : vector<8x1xf32>
    %82 = vector.broadcast %81 : vector<8x1xf32> to vector<8x32xf32>
    %83 = arith.subf %73, %82 : vector<8x32xf32>
    %84 = arith.mulf %83, %83 : vector<8x32xf32>
    %cst_47 = arith.constant dense<0.000000e+00> : vector<8xf32>
    %85 = vector.multi_reduction <add>, %84, %cst_47 [1] : vector<8x32xf32> to vector<8xf32>
    %86 = vector.shape_cast %85 : vector<8xf32> to vector<8x1xf32>
    %cst_48 = arith.constant 3.200000e+01 : f32
    %87 = vector.broadcast %cst_48 : f32 to vector<8x1xf32>
    %88 = arith.divf %86, %87 : vector<8x1xf32>
    %cst_49 = arith.constant 9.99999996E-13 : f32
    %89 = vector.broadcast %cst_49 : f32 to vector<8x1xf32>
    %90 = arith.addf %88, %89 : vector<8x1xf32>
    %91 = math.rsqrt %90 : vector<8x1xf32>
    %92 = vector.broadcast %91 : vector<8x1xf32> to vector<8x32xf32>
    %93 = arith.mulf %83, %92 : vector<8x32xf32>
    %94 = vector.broadcast %75 : vector<1x32xf32> to vector<8x32xf32>
    %95 = arith.mulf %93, %94 : vector<8x32xf32>
    %96 = vector.broadcast %77 : vector<1x32xf32> to vector<8x32xf32>
    %97 = arith.addf %95, %96 : vector<8x32xf32>
    %c0_50 = arith.constant 0 : index
    %c0_51 = arith.constant 0 : index
    %c0_52 = arith.constant 0 : index
    %98 = vector.load %arg9[%c0_50, %c0_51, %c0_52] : memref<2x32x64xf32, #tpu.memory_space<vmem>>, vector<1x32x64xf32>
    %99 = vector.shape_cast %98 : vector<1x32x64xf32> to vector<32x64xf32>
    %cst_53 = arith.constant dense<0.000000e+00> : vector<8x64xf32>
    %100 = tpu.matmul %97, %99, %cst_53 {dimension_numbers = #tpu.dot_dimension_numbers<[1], [0], [0], [1], [0, 0, 1, 1], [], []>} : vector<8x32xf32>, vector<32x64xf32>, vector<8x64xf32> -> vector<8x64xf32>
    %c0_54 = arith.constant 0 : index
    %c0_55 = arith.constant 0 : index
    %c0_56 = arith.constant 0 : index
    %101 = vector.load %arg10[%c0_54, %c0_55, %c0_56] : memref<2x1x64xf32, #tpu.memory_space<vmem>>, vector<1x1x64xf32>
    %102 = vector.shape_cast %101 : vector<1x1x64xf32> to vector<1x64xf32>
    %103 = vector.broadcast %102 : vector<1x64xf32> to vector<8x64xf32>
    %104 = arith.addf %100, %103 : vector<8x64xf32>
    %cst_57 = arith.constant 5.000000e-01 : f32
    %105 = vector.broadcast %cst_57 : f32 to vector<8x64xf32>
    %106 = arith.mulf %105, %104 : vector<8x64xf32>
    %cst_58 = arith.constant 4.471500e-02 : f32
    %107 = vector.broadcast %cst_58 : f32 to vector<8x64xf32>
    %108 = arith.mulf %107, %104 : vector<8x64xf32>
    %109 = arith.mulf %108, %104 : vector<8x64xf32>
    %110 = arith.mulf %109, %104 : vector<8x64xf32>
    %111 = arith.addf %104, %110 : vector<8x64xf32>
    %cst_59 = arith.constant 0.797884583 : f32
    %112 = vector.broadcast %cst_59 : f32 to vector<8x64xf32>
    %113 = arith.mulf %112, %111 : vector<8x64xf32>
    %114 = math.tanh %113 : vector<8x64xf32>
    %cst_60 = arith.constant 1.000000e+00 : f32
    %115 = vector.broadcast %cst_60 : f32 to vector<8x64xf32>
    %116 = arith.addf %115, %114 : vector<8x64xf32>
    %117 = arith.mulf %106, %116 : vector<8x64xf32>
    %c0_61 = arith.constant 0 : index
    %c0_62 = arith.constant 0 : index
    %c0_63 = arith.constant 0 : index
    %118 = vector.load %arg11[%c0_61, %c0_62, %c0_63] : memref<2x64x32xf32, #tpu.memory_space<vmem>>, vector<1x64x32xf32>
    %119 = vector.shape_cast %118 : vector<1x64x32xf32> to vector<64x32xf32>
    %cst_64 = arith.constant dense<0.000000e+00> : vector<8x32xf32>
    %120 = tpu.matmul %117, %119, %cst_64 {dimension_numbers = #tpu.dot_dimension_numbers<[1], [0], [0], [1], [0, 0, 1, 1], [], []>} : vector<8x64xf32>, vector<64x32xf32>, vector<8x32xf32> -> vector<8x32xf32>
    %c5 = arith.constant 5 : index
    %c0_65 = arith.constant 0 : index
    %c0_66 = arith.constant 0 : index
    %121 = vector.load %arg5[%c5, %c0_65, %c0_66] : memref<14x1x32xf32, #tpu.memory_space<vmem>>, vector<1x1x32xf32>
    %122 = vector.shape_cast %121 : vector<1x1x32xf32> to vector<1x32xf32>
    %123 = vector.broadcast %122 : vector<1x32xf32> to vector<8x32xf32>
    %124 = arith.addf %120, %123 : vector<8x32xf32>
    %125 = arith.addf %124, %97 : vector<8x32xf32>
    %c6 = arith.constant 6 : index
    %c0_67 = arith.constant 0 : index
    %c0_68 = arith.constant 0 : index
    %126 = vector.load %arg5[%c6, %c0_67, %c0_68] : memref<14x1x32xf32, #tpu.memory_space<vmem>>, vector<1x1x32xf32>
    %127 = vector.shape_cast %126 : vector<1x1x32xf32> to vector<1x32xf32>
    %c7 = arith.constant 7 : index
    %c0_69 = arith.constant 0 : index
    %c0_70 = arith.constant 0 : index
    %128 = vector.load %arg5[%c7, %c0_69, %c0_70] : memref<14x1x32xf32, #tpu.memory_space<vmem>>, vector<1x1x32xf32>
    %129 = vector.shape_cast %128 : vector<1x1x32xf32> to vector<1x32xf32>
    %cst_71 = arith.constant dense<0.000000e+00> : vector<8xf32>
    %130 = vector.multi_reduction <add>, %125, %cst_71 [1] : vector<8x32xf32> to vector<8xf32>
    %131 = vector.shape_cast %130 : vector<8xf32> to vector<8x1xf32>
    %cst_72 = arith.constant 3.200000e+01 : f32
    %132 = vector.broadcast %cst_72 : f32 to vector<8x1xf32>
    %133 = arith.divf %131, %132 : vector<8x1xf32>
    %134 = vector.broadcast %133 : vector<8x1xf32> to vector<8x32xf32>
    %135 = arith.subf %125, %134 : vector<8x32xf32>
    %136 = arith.mulf %135, %135 : vector<8x32xf32>
    %cst_73 = arith.constant dense<0.000000e+00> : vector<8xf32>
    %137 = vector.multi_reduction <add>, %136, %cst_73 [1] : vector<8x32xf32> to vector<8xf32>
    %138 = vector.shape_cast %137 : vector<8xf32> to vector<8x1xf32>
    %cst_74 = arith.constant 3.200000e+01 : f32
    %139 = vector.broadcast %cst_74 : f32 to vector<8x1xf32>
    %140 = arith.divf %138, %139 : vector<8x1xf32>
    %cst_75 = arith.constant 9.99999996E-13 : f32
    %141 = vector.broadcast %cst_75 : f32 to vector<8x1xf32>
    %142 = arith.addf %140, %141 : vector<8x1xf32>
    %143 = math.rsqrt %142 : vector<8x1xf32>
    %144 = vector.broadcast %143 : vector<8x1xf32> to vector<8x32xf32>
    %145 = arith.mulf %135, %144 : vector<8x32xf32>
    %146 = vector.broadcast %127 : vector<1x32xf32> to vector<8x32xf32>
    %147 = arith.mulf %145, %146 : vector<8x32xf32>
    %148 = vector.broadcast %129 : vector<1x32xf32> to vector<8x32xf32>
    %149 = arith.addf %147, %148 : vector<8x32xf32>
    %150 = vector.shape_cast %149 : vector<8x32xf32> to vector<1x8x32xf32>
    %151 = vector.shape_cast %150 : vector<1x8x32xf32> to vector<1x8x32xf32>
    %152 = vector.broadcast %151 : vector<1x8x32xf32> to vector<12x8x32xf32>
    %c1_76 = arith.constant 1 : index
    %c0_77 = arith.constant 0 : index
    %c0_78 = arith.constant 0 : index
    %c0_79 = arith.constant 0 : index
    %153 = vector.load %arg6[%c1_76, %c0_77, %c0_78, %c0_79] : memref<2x12x32x8xf32, #tpu.memory_space<vmem>>, vector<1x12x32x8xf32>
    %154 = vector.shape_cast %153 : vector<1x12x32x8xf32> to vector<12x32x8xf32>
    "tpu.trace_start"() <{level = 10 : i32, message = "nsd,ndk->nsk"}> : () -> ()
    %cst_80 = arith.constant dense<0.000000e+00> : vector<12x8x8xf32>
    %155 = tpu.matmul %152, %154, %cst_80 {dimension_numbers = #tpu.dot_dimension_numbers<[2], [1], [1], [2], [0, 0, 0, 1, 1, 2], [0], [0]>} : vector<12x8x32xf32>, vector<12x32x8xf32>, vector<12x8x8xf32> -> vector<12x8x8xf32>
    "tpu.trace_stop"() : () -> ()
    %c1_81 = arith.constant 1 : index
    %c0_82 = arith.constant 0 : index
    %c0_83 = arith.constant 0 : index
    %c0_84 = arith.constant 0 : index
    %156 = vector.load %arg7[%c1_81, %c0_82, %c0_83, %c0_84] : memref<2x12x1x8xf32, #tpu.memory_space<vmem>>, vector<1x12x1x8xf32>
    %157 = vector.shape_cast %156 : vector<1x12x1x8xf32> to vector<12x1x8xf32>
    %158 = vector.broadcast %157 : vector<12x1x8xf32> to vector<12x8x8xf32>
    %159 = arith.addf %155, %158 : vector<12x8x8xf32>
    %160 = vector.extract_strided_slice %159 {offsets = [0, 0, 0], sizes = [4, 8, 8], strides = [1, 1, 1]} : vector<12x8x8xf32> to vector<4x8x8xf32>
    %161 = vector.extract_strided_slice %159 {offsets = [4, 0, 0], sizes = [4, 8, 8], strides = [1, 1, 1]} : vector<12x8x8xf32> to vector<4x8x8xf32>
    %162 = vector.extract_strided_slice %159 {offsets = [8, 0, 0], sizes = [4, 8, 8], strides = [1, 1, 1]} : vector<12x8x8xf32> to vector<4x8x8xf32>
    "tpu.trace_start"() <{level = 10 : i32, message = "hsd,htd->hst"}> : () -> ()
    %cst_85 = arith.constant dense<0.000000e+00> : vector<4x8x8xf32>
    %163 = tpu.matmul %160, %161, %cst_85 {dimension_numbers = #tpu.dot_dimension_numbers<[2], [2], [1], [1], [0, 0, 0, 1, 1, 1], [0], [0]>} : vector<4x8x8xf32>, vector<4x8x8xf32>, vector<4x8x8xf32> -> vector<4x8x8xf32>
    "tpu.trace_stop"() : () -> ()
    %164 = vector.broadcast %38 : vector<1x1x8xf32> to vector<4x8x8xf32>
    %165 = arith.addf %163, %164 : vector<4x8x8xf32>
    %cst_86 = arith.constant dense<0xFF800000> : vector<4x8xf32>
    %166 = vector.multi_reduction <maximumf>, %165, %cst_86 [2] : vector<4x8x8xf32> to vector<4x8xf32>
    %167 = vector.shape_cast %166 : vector<4x8xf32> to vector<4x8x1xf32>
    %168 = vector.broadcast %167 : vector<4x8x1xf32> to vector<4x8x8xf32>
    %169 = arith.subf %165, %168 : vector<4x8x8xf32>
    %170 = math.exp %169 : vector<4x8x8xf32>
    %cst_87 = arith.constant dense<0.000000e+00> : vector<4x8xf32>
    %171 = vector.multi_reduction <add>, %170, %cst_87 [2] : vector<4x8x8xf32> to vector<4x8xf32>
    %172 = vector.shape_cast %171 : vector<4x8xf32> to vector<4x8x1xf32>
    %173 = vector.broadcast %172 : vector<4x8x1xf32> to vector<4x8x8xf32>
    %174 = arith.divf %170, %173 : vector<4x8x8xf32>
    "tpu.trace_start"() <{level = 10 : i32, message = "hst,htd->hsd"}> : () -> ()
    %cst_88 = arith.constant dense<0.000000e+00> : vector<4x8x8xf32>
    %175 = tpu.matmul %174, %162, %cst_88 {dimension_numbers = #tpu.dot_dimension_numbers<[2], [1], [1], [2], [0, 0, 0, 1, 1, 2], [0], [0]>} : vector<4x8x8xf32>, vector<4x8x8xf32>, vector<4x8x8xf32> -> vector<4x8x8xf32>
    "tpu.trace_stop"() : () -> ()
    %c1_89 = arith.constant 1 : index
    %c0_90 = arith.constant 0 : index
    %c0_91 = arith.constant 0 : index
    %c0_92 = arith.constant 0 : index
    %176 = vector.load %arg8[%c1_89, %c0_90, %c0_91, %c0_92] : memref<2x4x8x32xf32, #tpu.memory_space<vmem>>, vector<1x4x8x32xf32>
    %177 = vector.shape_cast %176 : vector<1x4x8x32xf32> to vector<4x8x32xf32>
    "tpu.trace_start"() <{level = 10 : i32, message = "hsd,hdk->hsk"}> : () -> ()
    %cst_93 = arith.constant dense<0.000000e+00> : vector<4x8x32xf32>
    %178 = tpu.matmul %175, %177, %cst_93 {dimension_numbers = #tpu.dot_dimension_numbers<[2], [1], [1], [2], [0, 0, 0, 1, 1, 2], [0], [0]>} : vector<4x8x8xf32>, vector<4x8x32xf32>, vector<4x8x32xf32> -> vector<4x8x32xf32>
    "tpu.trace_stop"() : () -> ()
    %cst_94 = arith.constant dense<0.000000e+00> : vector<8x32xf32>
    %179 = vector.multi_reduction <add>, %178, %cst_94 [0] : vector<4x8x32xf32> to vector<8x32xf32>
    %c8 = arith.constant 8 : index
    %c0_95 = arith.constant 0 : index
    %c0_96 = arith.constant 0 : index
    %180 = vector.load %arg5[%c8, %c0_95, %c0_96] : memref<14x1x32xf32, #tpu.memory_space<vmem>>, vector<1x1x32xf32>
    %181 = vector.shape_cast %180 : vector<1x1x32xf32> to vector<1x32xf32>
    %182 = vector.broadcast %181 : vector<1x32xf32> to vector<8x32xf32>
    %183 = arith.addf %179, %182 : vector<8x32xf32>
    %184 = arith.addf %183, %149 : vector<8x32xf32>
    %c9 = arith.constant 9 : index
    %c0_97 = arith.constant 0 : index
    %c0_98 = arith.constant 0 : index
    %185 = vector.load %arg5[%c9, %c0_97, %c0_98] : memref<14x1x32xf32, #tpu.memory_space<vmem>>, vector<1x1x32xf32>
    %186 = vector.shape_cast %185 : vector<1x1x32xf32> to vector<1x32xf32>
    %c10 = arith.constant 10 : index
    %c0_99 = arith.constant 0 : index
    %c0_100 = arith.constant 0 : index
    %187 = vector.load %arg5[%c10, %c0_99, %c0_100] : memref<14x1x32xf32, #tpu.memory_space<vmem>>, vector<1x1x32xf32>
    %188 = vector.shape_cast %187 : vector<1x1x32xf32> to vector<1x32xf32>
    %cst_101 = arith.constant dense<0.000000e+00> : vector<8xf32>
    %189 = vector.multi_reduction <add>, %184, %cst_101 [1] : vector<8x32xf32> to vector<8xf32>
    %190 = vector.shape_cast %189 : vector<8xf32> to vector<8x1xf32>
    %cst_102 = arith.constant 3.200000e+01 : f32
    %191 = vector.broadcast %cst_102 : f32 to vector<8x1xf32>
    %192 = arith.divf %190, %191 : vector<8x1xf32>
    %193 = vector.broadcast %192 : vector<8x1xf32> to vector<8x32xf32>
    %194 = arith.subf %184, %193 : vector<8x32xf32>
    %195 = arith.mulf %194, %194 : vector<8x32xf32>
    %cst_103 = arith.constant dense<0.000000e+00> : vector<8xf32>
    %196 = vector.multi_reduction <add>, %195, %cst_103 [1] : vector<8x32xf32> to vector<8xf32>
    %197 = vector.shape_cast %196 : vector<8xf32> to vector<8x1xf32>
    %cst_104 = arith.constant 3.200000e+01 : f32
    %198 = vector.broadcast %cst_104 : f32 to vector<8x1xf32>
    %199 = arith.divf %197, %198 : vector<8x1xf32>
    %cst_105 = arith.constant 9.99999996E-13 : f32
    %200 = vector.broadcast %cst_105 : f32 to vector<8x1xf32>
    %201 = arith.addf %199, %200 : vector<8x1xf32>
    %202 = math.rsqrt %201 : vector<8x1xf32>
    %203 = vector.broadcast %202 : vector<8x1xf32> to vector<8x32xf32>
    %204 = arith.mulf %194, %203 : vector<8x32xf32>
    %205 = vector.broadcast %186 : vector<1x32xf32> to vector<8x32xf32>
    %206 = arith.mulf %204, %205 : vector<8x32xf32>
    %207 = vector.broadcast %188 : vector<1x32xf32> to vector<8x32xf32>
    %208 = arith.addf %206, %207 : vector<8x32xf32>
    %c1_106 = arith.constant 1 : index
    %c0_107 = arith.constant 0 : index
    %c0_108 = arith.constant 0 : index
    %209 = vector.load %arg9[%c1_106, %c0_107, %c0_108] : memref<2x32x64xf32, #tpu.memory_space<vmem>>, vector<1x32x64xf32>
    %210 = vector.shape_cast %209 : vector<1x32x64xf32> to vector<32x64xf32>
    %cst_109 = arith.constant dense<0.000000e+00> : vector<8x64xf32>
    %211 = tpu.matmul %208, %210, %cst_109 {dimension_numbers = #tpu.dot_dimension_numbers<[1], [0], [0], [1], [0, 0, 1, 1], [], []>} : vector<8x32xf32>, vector<32x64xf32>, vector<8x64xf32> -> vector<8x64xf32>
    %c1_110 = arith.constant 1 : index
    %c0_111 = arith.constant 0 : index
    %c0_112 = arith.constant 0 : index
    %212 = vector.load %arg10[%c1_110, %c0_111, %c0_112] : memref<2x1x64xf32, #tpu.memory_space<vmem>>, vector<1x1x64xf32>
    %213 = vector.shape_cast %212 : vector<1x1x64xf32> to vector<1x64xf32>
    %214 = vector.broadcast %213 : vector<1x64xf32> to vector<8x64xf32>
    %215 = arith.addf %211, %214 : vector<8x64xf32>
    %cst_113 = arith.constant 5.000000e-01 : f32
    %216 = vector.broadcast %cst_113 : f32 to vector<8x64xf32>
    %217 = arith.mulf %216, %215 : vector<8x64xf32>
    %cst_114 = arith.constant 4.471500e-02 : f32
    %218 = vector.broadcast %cst_114 : f32 to vector<8x64xf32>
    %219 = arith.mulf %218, %215 : vector<8x64xf32>
    %220 = arith.mulf %219, %215 : vector<8x64xf32>
    %221 = arith.mulf %220, %215 : vector<8x64xf32>
    %222 = arith.addf %215, %221 : vector<8x64xf32>
    %cst_115 = arith.constant 0.797884583 : f32
    %223 = vector.broadcast %cst_115 : f32 to vector<8x64xf32>
    %224 = arith.mulf %223, %222 : vector<8x64xf32>
    %225 = math.tanh %224 : vector<8x64xf32>
    %cst_116 = arith.constant 1.000000e+00 : f32
    %226 = vector.broadcast %cst_116 : f32 to vector<8x64xf32>
    %227 = arith.addf %226, %225 : vector<8x64xf32>
    %228 = arith.mulf %217, %227 : vector<8x64xf32>
    %c1_117 = arith.constant 1 : index
    %c0_118 = arith.constant 0 : index
    %c0_119 = arith.constant 0 : index
    %229 = vector.load %arg11[%c1_117, %c0_118, %c0_119] : memref<2x64x32xf32, #tpu.memory_space<vmem>>, vector<1x64x32xf32>
    %230 = vector.shape_cast %229 : vector<1x64x32xf32> to vector<64x32xf32>
    %cst_120 = arith.constant dense<0.000000e+00> : vector<8x32xf32>
    %231 = tpu.matmul %228, %230, %cst_120 {dimension_numbers = #tpu.dot_dimension_numbers<[1], [0], [0], [1], [0, 0, 1, 1], [], []>} : vector<8x64xf32>, vector<64x32xf32>, vector<8x32xf32> -> vector<8x32xf32>
    %c11 = arith.constant 11 : index
    %c0_121 = arith.constant 0 : index
    %c0_122 = arith.constant 0 : index
    %232 = vector.load %arg5[%c11, %c0_121, %c0_122] : memref<14x1x32xf32, #tpu.memory_space<vmem>>, vector<1x1x32xf32>
    %233 = vector.shape_cast %232 : vector<1x1x32xf32> to vector<1x32xf32>
    %234 = vector.broadcast %233 : vector<1x32xf32> to vector<8x32xf32>
    %235 = arith.addf %231, %234 : vector<8x32xf32>
    %236 = arith.addf %235, %208 : vector<8x32xf32>
    %c12 = arith.constant 12 : index
    %c0_123 = arith.constant 0 : index
    %c0_124 = arith.constant 0 : index
    %237 = vector.load %arg5[%c12, %c0_123, %c0_124] : memref<14x1x32xf32, #tpu.memory_space<vmem>>, vector<1x1x32xf32>
    %238 = vector.shape_cast %237 : vector<1x1x32xf32> to vector<1x32xf32>
    %c13 = arith.constant 13 : index
    %c0_125 = arith.constant 0 : index
    %c0_126 = arith.constant 0 : index
    %239 = vector.load %arg5[%c13, %c0_125, %c0_126] : memref<14x1x32xf32, #tpu.memory_space<vmem>>, vector<1x1x32xf32>
    %240 = vector.shape_cast %239 : vector<1x1x32xf32> to vector<1x32xf32>
    %cst_127 = arith.constant dense<0.000000e+00> : vector<8xf32>
    %241 = vector.multi_reduction <add>, %236, %cst_127 [1] : vector<8x32xf32> to vector<8xf32>
    %242 = vector.shape_cast %241 : vector<8xf32> to vector<8x1xf32>
    %cst_128 = arith.constant 3.200000e+01 : f32
    %243 = vector.broadcast %cst_128 : f32 to vector<8x1xf32>
    %244 = arith.divf %242, %243 : vector<8x1xf32>
    %245 = vector.broadcast %244 : vector<8x1xf32> to vector<8x32xf32>
    %246 = arith.subf %236, %245 : vector<8x32xf32>
    %247 = arith.mulf %246, %246 : vector<8x32xf32>
    %cst_129 = arith.constant dense<0.000000e+00> : vector<8xf32>
    %248 = vector.multi_reduction <add>, %247, %cst_129 [1] : vector<8x32xf32> to vector<8xf32>
    %249 = vector.shape_cast %248 : vector<8xf32> to vector<8x1xf32>
    %cst_130 = arith.constant 3.200000e+01 : f32
    %250 = vector.broadcast %cst_130 : f32 to vector<8x1xf32>
    %251 = arith.divf %249, %250 : vector<8x1xf32>
    %cst_131 = arith.constant 9.99999996E-13 : f32
    %252 = vector.broadcast %cst_131 : f32 to vector<8x1xf32>
    %253 = arith.addf %251, %252 : vector<8x1xf32>
    %254 = math.rsqrt %253 : vector<8x1xf32>
    %255 = vector.broadcast %254 : vector<8x1xf32> to vector<8x32xf32>
    %256 = arith.mulf %246, %255 : vector<8x32xf32>
    %257 = vector.broadcast %238 : vector<1x32xf32> to vector<8x32xf32>
    %258 = arith.mulf %256, %257 : vector<8x32xf32>
    %259 = vector.broadcast %240 : vector<1x32xf32> to vector<8x32xf32>
    %260 = arith.addf %258, %259 : vector<8x32xf32>
    %c0_132 = arith.constant 0 : index
    %c0_133 = arith.constant 0 : index
    %261 = vector.load %arg12[%c0_132, %c0_133] : memref<33x5xf32, #tpu.memory_space<vmem>>, vector<32x5xf32>
    %c32 = arith.constant 32 : index
    %c0_134 = arith.constant 0 : index
    %262 = vector.load %arg12[%c32, %c0_134] : memref<33x5xf32, #tpu.memory_space<vmem>>, vector<1x5xf32>
    %cst_135 = arith.constant dense<0.000000e+00> : vector<8x5xf32>
    %263 = tpu.matmul %260, %261, %cst_135 {dimension_numbers = #tpu.dot_dimension_numbers<[1], [0], [0], [1], [0, 0, 1, 1], [], []>} : vector<8x32xf32>, vector<32x5xf32>, vector<8x5xf32> -> vector<8x5xf32>
    %264 = vector.broadcast %262 : vector<1x5xf32> to vector<8x5xf32>
    %265 = arith.addf %263, %264 : vector<8x5xf32>
    %c0_136 = arith.constant 0 : index
    %c0_137 = arith.constant 0 : index
    %c0_138 = arith.constant 0 : index
    %266 = vector.load %arg13[%c0_136, %c0_137, %c0_138] : memref<1x8x5xf32, #tpu.memory_space<vmem>>, vector<1x8x5xf32>
    %267 = vector.shape_cast %266 : vector<1x8x5xf32> to vector<8x5xf32>
    %268 = vector.shape_cast %265 : vector<8x5xf32> to vector<1x8x5xf32>
    tpu.vector_store %arg13[%c0_136, %c0_137, %c0_138], %268 {strides = array<i32>} : memref<1x8x5xf32, #tpu.memory_space<vmem>>, vector<1x8x5xf32>,
    return
  }
  func.func @transform_0(%arg0: i32) -> (i32, i32) {
    %c0_i32 = arith.constant 0 : i32
    %c0_i32_0 = arith.constant 0 : i32
    return %arg0, %c0_i32 : i32, i32
  }
  func.func @transform_1(%arg0: i32) -> (i32, i32, i32) {
    %c0_i32 = arith.constant 0 : i32
    %c0_i32_0 = arith.constant 0 : i32
    %c0_i32_1 = arith.constant 0 : i32
    return %arg0, %c0_i32, %c0_i32_0 : i32, i32, i32
  }
  func.func @transform_2(%arg0: i32) -> (i32, i32) {
    %c0_i32 = arith.constant 0 : i32
    %c0_i32_0 = arith.constant 0 : i32
    %c0_i32_1 = arith.constant 0 : i32
    return %c0_i32, %c0_i32_0 : i32, i32
  }
  func.func @transform_3(%arg0: i32) -> (i32, i32) {
    %c0_i32 = arith.constant 0 : i32
    %c0_i32_0 = arith.constant 0 : i32
    %c0_i32_1 = arith.constant 0 : i32
    return %c0_i32, %c0_i32_0 : i32, i32
  }
  func.func @transform_4(%arg0: i32) -> (i32, i32, i32) {
    %c0_i32 = arith.constant 0 : i32
    %c0_i32_0 = arith.constant 0 : i32
    %c0_i32_1 = arith.constant 0 : i32
    %c0_i32_2 = arith.constant 0 : i32
    return %c0_i32, %c0_i32_0, %c0_i32_1 : i32, i32, i32
  }
  func.func @transform_5(%arg0: i32) -> (i32, i32, i32, i32) {
    %c0_i32 = arith.constant 0 : i32
    %c0_i32_0 = arith.constant 0 : i32
    %c0_i32_1 = arith.constant 0 : i32
    %c0_i32_2 = arith.constant 0 : i32
    %c0_i32_3 = arith.constant 0 : i32
    return %c0_i32, %c0_i32_0, %c0_i32_1, %c0_i32_2 : i32, i32, i32, i32
  }
  func.func @transform_6(%arg0: i32) -> (i32, i32, i32, i32) {
    %c0_i32 = arith.constant 0 : i32
    %c0_i32_0 = arith.constant 0 : i32
    %c0_i32_1 = arith.constant 0 : i32
    %c0_i32_2 = arith.constant 0 : i32
    %c0_i32_3 = arith.constant 0 : i32
    return %c0_i32, %c0_i32_0, %c0_i32_1, %c0_i32_2 : i32, i32, i32, i32
  }
  func.func @transform_7(%arg0: i32) -> (i32, i32, i32, i32) {
    %c0_i32 = arith.constant 0 : i32
    %c0_i32_0 = arith.constant 0 : i32
    %c0_i32_1 = arith.constant 0 : i32
    %c0_i32_2 = arith.constant 0 : i32
    %c0_i32_3 = arith.constant 0 : i32
    return %c0_i32, %c0_i32_0, %c0_i32_1, %c0_i32_2 : i32, i32, i32, i32
  }
  func.func @transform_8(%arg0: i32) -> (i32, i32, i32) {
    %c0_i32 = arith.constant 0 : i32
    %c0_i32_0 = arith.constant 0 : i32
    %c0_i32_1 = arith.constant 0 : i32
    %c0_i32_2 = arith.constant 0 : i32
    return %c0_i32, %c0_i32_0, %c0_i32_1 : i32, i32, i32
  }
  func.func @transform_9(%arg0: i32) -> (i32, i32, i32) {
    %c0_i32 = arith.constant 0 : i32
    %c0_i32_0 = arith.constant 0 : i32
    %c0_i32_1 = arith.constant 0 : i32
    %c0_i32_2 = arith.constant 0 : i32
    return %c0_i32, %c0_i32_0, %c0_i32_1 : i32, i32, i32
  }
  func.func @transform_10(%arg0: i32) -> (i32, i32, i32) {
    %c0_i32 = arith.constant 0 : i32
    %c0_i32_0 = arith.constant 0 : i32
    %c0_i32_1 = arith.constant 0 : i32
    %c0_i32_2 = arith.constant 0 : i32
    return %c0_i32, %c0_i32_0, %c0_i32_1 : i32, i32, i32
  }
  func.func @transform_11(%arg0: i32) -> (i32, i32) {
    %c0_i32 = arith.constant 0 : i32
    %c0_i32_0 = arith.constant 0 : i32
    %c0_i32_1 = arith.constant 0 : i32
    return %c0_i32, %c0_i32_0 : i32, i32
  }
  func.func @transform_12(%arg0: i32) -> (i32, i32, i32) {
    %c0_i32 = arith.constant 0 : i32
    %c0_i32_0 = arith.constant 0 : i32
    %c0_i32_1 = arith.constant 0 : i32
    return %arg0, %c0_i32, %c0_i32_0 : i32, i32, i32
  }
}

</mosaic_0001>

<llo_original>
// kernel: bert_token_classifier_forward.1
$region0: #{bert_token_classifier_forward.1}
  #allocation0 [shape = 'u32[]', space=smem, size = 0x4, offset = 0x4, fixed_abs, tag = 'smem constant byte address 0x4 - core index']
  #allocation1 [shape = 'u32[72,128]{1,0:T(1,128)}', space=vmem, size = 0x9000, scoped, tag = 'internal scratch']
  %s0 = inlined_call_operand.vmem [shape: s32[16,1], index: 0, kind: input, shape index: {}]
  %s1 = inlined_call_operand.vmem [shape: f32[2,1,8], index: 1, kind: input, shape index: {}]
  %s2 = inlined_call_operand.vmem [shape: f32[128,32], index: 2, kind: input, shape index: {}]
  %s3 = inlined_call_operand.vmem [shape: f32[16,32], index: 3, kind: input, shape index: {}]
  %s4 = inlined_call_operand.vmem [shape: f32[14,1,32], index: 4, kind: input, shape index: {}]
  %s5 = inlined_call_operand.vmem [shape: f32[2,12,32,8], index: 5, kind: input, shape index: {}]
  %s6 = inlined_call_operand.vmem [shape: f32[2,12,1,8], index: 6, kind: input, shape index: {}]
  %s7 = inlined_call_operand.vmem [shape: f32[2,4,8,32], index: 7, kind: input, shape index: {}]
  %s8 = inlined_call_operand.vmem [shape: f32[2,32,64], index: 8, kind: input, shape index: {}]
  %s9 = inlined_call_operand.vmem [shape: f32[2,1,64], index: 9, kind: input, shape index: {}]
  %s10 = inlined_call_operand.vmem [shape: f32[2,64,32], index: 10, kind: input, shape index: {}]
  %s11 = inlined_call_operand.vmem [shape: f32[33,5], index: 11, kind: input, shape index: {}]
  %s12 = inlined_call_operand.vmem [shape: f32[2,8,5], index: 12, kind: output, shape index: {}]
  %s13 = sld [smem:[#allocation0]]
  $region81: #{bert_token_classifier_forward.1} parent=0
    _
  %s15 = ssub.s32 1, %s13
  %s16 = scalar_select 0, %s15, %s13
  loop: start=0, step=1, limit=4
  $region2: #{bert_token_classifier_forward.1} parent=0 // loop_pre_header
    _
  $region3: #{bert_token_classifier_forward.1} parent=0 // loop_header
    %s18 = sphi 0, %s22
    %p19 = scmp.ge.s32.totalorder %s18, 4
    %s28 = sphi 0, %s30
    %s31 = sphi 0, %s28
    %s32 = sphi 0, %s31
    %s48 = sphi 0, %s32
    %s54 = sphi 0, %s56
    %s57 = sphi 0, %s54
    %s58 = sphi 0, %s57
    %s74 = sphi 0, %s58
    %s78 = sphi 0, %s78
    %s80 = sphi 0, %s78
    %s81 = sphi 0, %s80
    %s95 = sphi 0, %s81
    %s99 = sphi 0, %s99
    %s101 = sphi 0, %s99
    %s102 = sphi 0, %s101
    %s116 = sphi 0, %s102
    %s120 = sphi 0, %s120
    %s122 = sphi 0, %s120
    %s123 = sphi 0, %s122
    %s137 = sphi 0, %s123
    %s141 = sphi 0, %s141
    %s143 = sphi 0, %s141
    %s144 = sphi 0, %s143
    %s158 = sphi 0, %s144
    %s162 = sphi 0, %s162
    %s164 = sphi 0, %s162
    %s165 = sphi 0, %s164
    %s179 = sphi 0, %s165
    %s183 = sphi 0, %s183
    %s185 = sphi 0, %s183
    %s186 = sphi 0, %s185
    %s200 = sphi 0, %s186
    %s204 = sphi 0, %s204
    %s206 = sphi 0, %s204
    %s207 = sphi 0, %s206
    %s221 = sphi 0, %s207
    %s225 = sphi 0, %s225
    %s227 = sphi 0, %s225
    %s228 = sphi 0, %s227
    %s242 = sphi 0, %s228
    %s246 = sphi 0, %s246
    %s248 = sphi 0, %s246
    %s249 = sphi 0, %s248
    %s263 = sphi 0, %s249
    %s267 = sphi 0, %s267
    %s269 = sphi 0, %s267
    %s270 = sphi 0, %s269
    %s284 = sphi 0, %s270
    %s290 = sphi 0, %s292
    %s293 = sphi 0, %s290
    %s294 = sphi 0, %s293
    %s310 = sphi 0, %s294
  $region4: #{bert_token_classifier_forward.1} parent=0 // loop_header_branch
    %21 = sbr.rel (%p19) target = $region8
  $region5: #{bert_token_classifier_forward.1} parent=0 // loop_body
    %s23 = ssub.s32 %s18, 1
    %s24 = ssub.s32 %s18, 2
    %s25 = sadd.s32 %s18, 1
    %s26 = ssub.s32 %s18, %s25
    %p27 = scmp.eq.s32.totalorder %s26, 0
    %s29 = sadd.s32 %s28, 1
    %s30 = scalar_select %p27, %s28, %s29
    %p33 = pneg %p27
    %p34 = scmp.eq.s32.totalorder %s18, 1
    %p35 = por %p33, %p34
    %p36 = scmp.ne.s32.totalorder %s28, %s31
    %p37 = scmp.eq.s32.totalorder %s18, 0
    %p38 = por %p36, %p37
    %p39 = scmp.ne.s32.totalorder %s28, %s31
    %p40 = scmp.eq.s32.totalorder %s23, 1
    %p41 = por %p39, %p40
    %p42 = scmp.ne.s32.totalorder %s31, %s32
    %p43 = scmp.eq.s32.totalorder %s23, 0
    %p44 = por %p42, %p43
    %p45 = scmp.ne.s32.totalorder %s31, %s32
    %p46 = scmp.eq.s32.totalorder %s24, 1
    %p47 = por %p45, %p46
    %p49 = scmp.ne.s32.totalorder %s32, %s48
    %p50 = scmp.eq.s32.totalorder %s24, 0
    %p51 = por %p49, %p50
    %s52 = ssub.s32 %s18, %s25
    %p53 = scmp.eq.s32.totalorder %s52, 0
    %s55 = sadd.s32 %s54, 1
    %s56 = scalar_select %p53, %s54, %s55
    %p59 = pneg %p53
    %p60 = scmp.eq.s32.totalorder %s18, 1
    %p61 = por %p59, %p60
    %p62 = scmp.ne.s32.totalorder %s54, %s57
    %p63 = scmp.eq.s32.totalorder %s18, 0
    %p64 = por %p62, %p63
    %p65 = scmp.ne.s32.totalorder %s54, %s57
    %p66 = scmp.eq.s32.totalorder %s23, 1
    %p67 = por %p65, %p66
    %p68 = scmp.ne.s32.totalorder %s57, %s58
    %p69 = scmp.eq.s32.totalorder %s23, 0
    %p70 = por %p68, %p69
    %p71 = scmp.ne.s32.totalorder %s57, %s58
    %p72 = scmp.eq.s32.totalorder %s24, 1
    %p73 = por %p71, %p72
    %p75 = scmp.ne.s32.totalorder %s58, %s74
    %p76 = scmp.eq.s32.totalorder %s24, 0
    %p77 = por %p75, %p76
    %s79 = sadd.s32 %s78, 1
    %p82 = scmp.eq.s32.totalorder %s18, 1
    %p83 = scmp.ne.s32.totalorder %s78, %s80
    %p84 = scmp.eq.s32.totalorder %s18, 0
    %p85 = por %p83, %p84
    %p86 = scmp.ne.s32.totalorder %s78, %s80
    %p87 = scmp.eq.s32.totalorder %s23, 1
    %p88 = por %p86, %p87
    %p89 = scmp.ne.s32.totalorder %s80, %s81
    %p90 = scmp.eq.s32.totalorder %s23, 0
    %p91 = por %p89, %p90
    %p92 = scmp.ne.s32.totalorder %s80, %s81
    %p93 = scmp.eq.s32.totalorder %s24, 1
    %p94 = por %p92, %p93
    %p96 = scmp.ne.s32.totalorder %s81, %s95
    %p97 = scmp.eq.s32.totalorder %s24, 0
    %p98 = por %p96, %p97
    %s100 = sadd.s32 %s99, 1
    %p103 = scmp.eq.s32.totalorder %s18, 1
    %p104 = scmp.ne.s32.totalorder %s99, %s101
    %p105 = scmp.eq.s32.totalorder %s18, 0
    %p106 = por %p104, %p105
    %p107 = scmp.ne.s32.totalorder %s99, %s101
    %p108 = scmp.eq.s32.totalorder %s23, 1
    %p109 = por %p107, %p108
    %p110 = scmp.ne.s32.totalorder %s101, %s102
    %p111 = scmp.eq.s32.totalorder %s23, 0
    %p112 = por %p110, %p111
    %p113 = scmp.ne.s32.totalorder %s101, %s102
    %p114 = scmp.eq.s32.totalorder %s24, 1
    %p115 = por %p113, %p114
    %p117 = scmp.ne.s32.totalorder %s102, %s116
    %p118 = scmp.eq.s32.totalorder %s24, 0
    %p119 = por %p117, %p118
    %s121 = sadd.s32 %s120, 1
    %p124 = scmp.eq.s32.totalorder %s18, 1
    %p125 = scmp.ne.s32.totalorder %s120, %s122
    %p126 = scmp.eq.s32.totalorder %s18, 0
    %p127 = por %p125, %p126
    %p128 = scmp.ne.s32.totalorder %s120, %s122
    %p129 = scmp.eq.s32.totalorder %s23, 1
    %p130 = por %p128, %p129
    %p131 = scmp.ne.s32.totalorder %s122, %s123
    %p132 = scmp.eq.s32.totalorder %s23, 0
    %p133 = por %p131, %p132
    %p134 = scmp.ne.s32.totalorder %s122, %s123
    %p135 = scmp.eq.s32.totalorder %s24, 1
    %p136 = por %p134, %p135
    %p138 = scmp.ne.s32.totalorder %s123, %s137
    %p139 = scmp.eq.s32.totalorder %s24, 0
    %p140 = por %p138, %p139
    %s142 = sadd.s32 %s141, 1
    %p145 = scmp.eq.s32.totalorder %s18, 1
    %p146 = scmp.ne.s32.totalorder %s141, %s143
    %p147 = scmp.eq.s32.totalorder %s18, 0
    %p148 = por %p146, %p147
    %p149 = scmp.ne.s32.totalorder %s141, %s143
    %p150 = scmp.eq.s32.totalorder %s23, 1
    %p151 = por %p149, %p150
    %p152 = scmp.ne.s32.totalorder %s143, %s144
    %p153 = scmp.eq.s32.totalorder %s23, 0
    %p154 = por %p152, %p153
    %p155 = scmp.ne.s32.totalorder %s143, %s144
    %p156 = scmp.eq.s32.totalorder %s24, 1
    %p157 = por %p155, %p156
    %p159 = scmp.ne.s32.totalorder %s144, %s158
    %p160 = scmp.eq.s32.totalorder %s24, 0
    %p161 = por %p159, %p160
    %s163 = sadd.s32 %s162, 1
    %p166 = scmp.eq.s32.totalorder %s18, 1
    %p167 = scmp.ne.s32.totalorder %s162, %s164
    %p168 = scmp.eq.s32.totalorder %s18, 0
    %p169 = por %p167, %p168
    %p170 = scmp.ne.s32.totalorder %s162, %s164
    %p171 = scmp.eq.s32.totalorder %s23, 1
    %p172 = por %p170, %p171
    %p173 = scmp.ne.s32.totalorder %s164, %s165
    %p174 = scmp.eq.s32.totalorder %s23, 0
    %p175 = por %p173, %p174
    %p176 = scmp.ne.s32.totalorder %s164, %s165
    %p177 = scmp.eq.s32.totalorder %s24, 1
    %p178 = por %p176, %p177
    %p180 = scmp.ne.s32.totalorder %s165, %s179
    %p181 = scmp.eq.s32.totalorder %s24, 0
    %p182 = por %p180, %p181
    %s184 = sadd.s32 %s183, 1
    %p187 = scmp.eq.s32.totalorder %s18, 1
    %p188 = scmp.ne.s32.totalorder %s183, %s185
    %p189 = scmp.eq.s32.totalorder %s18, 0
    %p190 = por %p188, %p189
    %p191 = scmp.ne.s32.totalorder %s183, %s185
    %p192 = scmp.eq.s32.totalorder %s23, 1
    %p193 = por %p191, %p192
    %p194 = scmp.ne.s32.totalorder %s185, %s186
    %p195 = scmp.eq.s32.totalorder %s23, 0
    %p196 = por %p194, %p195
    %p197 = scmp.ne.s32.totalorder %s185, %s186
    %p198 = scmp.eq.s32.totalorder %s24, 1
    %p199 = por %p197, %p198
    %p201 = scmp.ne.s32.totalorder %s186, %s200
    %p202 = scmp.eq.s32.totalorder %s24, 0
    %p203 = por %p201, %p202
    %s205 = sadd.s32 %s204, 1
    %p208 = scmp.eq.s32.totalorder %s18, 1
    %p209 = scmp.ne.s32.totalorder %s204, %s206
    %p210 = scmp.eq.s32.totalorder %s18, 0
    %p211 = por %p209, %p210
    %p212 = scmp.ne.s32.totalorder %s204, %s206
    %p213 = scmp.eq.s32.totalorder %s23, 1
    %p214 = por %p212, %p213
    %p215 = scmp.ne.s32.totalorder %s206, %s207
    %p216 = scmp.eq.s32.totalorder %s23, 0
    %p217 = por %p215, %p216
    %p218 = scmp.ne.s32.totalorder %s206, %s207
    %p219 = scmp.eq.s32.totalorder %s24, 1
    %p220 = por %p218, %p219
    %p222 = scmp.ne.s32.totalorder %s207, %s221
    %p223 = scmp.eq.s32.totalorder %s24, 0
    %p224 = por %p222, %p223
    %s226 = sadd.s32 %s225, 1
    %p229 = scmp.eq.s32.totalorder %s18, 1
    %p230 = scmp.ne.s32.totalorder %s225, %s227
    %p231 = scmp.eq.s32.totalorder %s18, 0
    %p232 = por %p230, %p231
    %p233 = scmp.ne.s32.totalorder %s225, %s227
    %p234 = scmp.eq.s32.totalorder %s23, 1
    %p235 = por %p233, %p234
    %p236 = scmp.ne.s32.totalorder %s227, %s228
    %p237 = scmp.eq.s32.totalorder %s23, 0
    %p238 = por %p236, %p237
    %p239 = scmp.ne.s32.totalorder %s227, %s228
    %p240 = scmp.eq.s32.totalorder %s24, 1
    %p241 = por %p239, %p240
    %p243 = scmp.ne.s32.totalorder %s228, %s242
    %p244 = scmp.eq.s32.totalorder %s24, 0
    %p245 = por %p243, %p244
    %s247 = sadd.s32 %s246, 1
    %p250 = scmp.eq.s32.totalorder %s18, 1
    %p251 = scmp.ne.s32.totalorder %s246, %s248
    %p252 = scmp.eq.s32.totalorder %s18, 0
    %p253 = por %p251, %p252
    %p254 = scmp.ne.s32.totalorder %s246, %s248
    %p255 = scmp.eq.s32.totalorder %s23, 1
    %p256 = por %p254, %p255
    %p257 = scmp.ne.s32.totalorder %s248, %s249
    %p258 = scmp.eq.s32.totalorder %s23, 0
    %p259 = por %p257, %p258
    %p260 = scmp.ne.s32.totalorder %s248, %s249
    %p261 = scmp.eq.s32.totalorder %s24, 1
    %p262 = por %p260, %p261
    %p264 = scmp.ne.s32.totalorder %s249, %s263
    %p265 = scmp.eq.s32.totalorder %s24, 0
    %p266 = por %p264, %p265
    %s268 = sadd.s32 %s267, 1
    %p271 = scmp.eq.s32.totalorder %s18, 1
    %p272 = scmp.ne.s32.totalorder %s267, %s269
    %p273 = scmp.eq.s32.totalorder %s18, 0
    %p274 = por %p272, %p273
    %p275 = scmp.ne.s32.totalorder %s267, %s269
    %p276 = scmp.eq.s32.totalorder %s23, 1
    %p277 = por %p275, %p276
    %p278 = scmp.ne.s32.totalorder %s269, %s270
    %p279 = scmp.eq.s32.totalorder %s23, 0
    %p280 = por %p278, %p279
    %p281 = scmp.ne.s32.totalorder %s269, %s270
    %p282 = scmp.eq.s32.totalorder %s24, 1
    %p283 = por %p281, %p282
    %p285 = scmp.ne.s32.totalorder %s270, %s284
    %p286 = scmp.eq.s32.totalorder %s24, 0
    %p287 = por %p285, %p286
    %s288 = ssub.s32 %s18, %s25
    %p289 = scmp.eq.s32.totalorder %s288, 0
    %s291 = sadd.s32 %s290, 1
    %s292 = scalar_select %p289, %s290, %s291
    %p295 = pneg %p289
    %p296 = scmp.eq.s32.totalorder %s18, 1
    %p297 = por %p295, %p296
    %p298 = scmp.ne.s32.totalorder %s290, %s293
    %p299 = scmp.eq.s32.totalorder %s18, 0
    %p300 = por %p298, %p299
    %p301 = scmp.ne.s32.totalorder %s290, %s293
    %p302 = scmp.eq.s32.totalorder %s23, 1
    %p303 = por %p301, %p302
    %p304 = scmp.ne.s32.totalorder %s293, %s294
    %p305 = scmp.eq.s32.totalorder %s23, 0
    %p306 = por %p304, %p305
    %p307 = scmp.ne.s32.totalorder %s293, %s294
    %p308 = scmp.eq.s32.totalorder %s24, 1
    %p309 = por %p307, %p308
    %p311 = scmp.ne.s32.totalorder %s294, %s310
    %p312 = scmp.eq.s32.totalorder %s24, 0
    %p313 = por %p311, %p312
    %p314 = scmp.le.s32.totalorder 1, %s18
    %p315 = scmp.lt.s32.totalorder %s18, 3
    %p316 = pnand %p314, %p315
    %p317 = pneg %p316
    // Predicated region
    $region9: #{bert_token_classifier_forward.1} parent=5 // pred_check
      _
    $region10: #{bert_token_classifier_forward.1} parent=5 // pred_check_branch
      %319 = sbr.rel (%p316) target = $region12
    $region11: #{bert_token_classifier_forward.1} parent=5 // pred_region
      %s320 = ssub.s32 %s18, 1
      // Predicated region
      $region13: #{bert_token_classifier_forward.1} parent=11 // pred_check
        %p321 = pneg %p91
      $region14: #{bert_token_classifier_forward.1} parent=11 // pred_check_branch
        %323 = sbr.rel (%p321) target = $region16
      $region15: #{bert_token_classifier_forward.1} parent=11 // pred_region
        _
      $region16: #{bert_token_classifier_forward.1} parent=11 // pred_fallthru
        _
      // Predicated region
      $region17: #{bert_token_classifier_forward.1} parent=11 // pred_check
        %p324 = pneg %p112
      $region18: #{bert_token_classifier_forward.1} parent=11 // pred_check_branch
        %326 = sbr.rel (%p324) target = $region20
      $region19: #{bert_token_classifier_forward.1} parent=11 // pred_region
        _
      $region20: #{bert_token_classifier_forward.1} parent=11 // pred_fallthru
        _
      // Predicated region
      $region21: #{bert_token_classifier_forward.1} parent=11 // pred_check
        %p327 = pneg %p133
      $region22: #{bert_token_classifier_forward.1} parent=11 // pred_check_branch
        %329 = sbr.rel (%p327) target = $region24
      $region23: #{bert_token_classifier_forward.1} parent=11 // pred_region
        _
      $region24: #{bert_token_classifier_forward.1} parent=11 // pred_fallthru
        _
      // Predicated region
      $region25: #{bert_token_classifier_forward.1} parent=11 // pred_check
        %p330 = pneg %p154
      $region26: #{bert_token_classifier_forward.1} parent=11 // pred_check_branch
        %332 = sbr.rel (%p330) target = $region28
      $region27: #{bert_token_classifier_forward.1} parent=11 // pred_region
        _
      $region28: #{bert_token_classifier_forward.1} parent=11 // pred_fallthru
        _
      // Predicated region
      $region29: #{bert_token_classifier_forward.1} parent=11 // pred_check
        %p333 = pneg %p175
      $region30: #{bert_token_classifier_forward.1} parent=11 // pred_check_branch
        %335 = sbr.rel (%p333) target = $region32
      $region31: #{bert_token_classifier_forward.1} parent=11 // pred_region
        _
      $region32: #{bert_token_classifier_forward.1} parent=11 // pred_fallthru
        _
      // Predicated region
      $region33: #{bert_token_classifier_forward.1} parent=11 // pred_check
        %p336 = pneg %p196
      $region34: #{bert_token_classifier_forward.1} parent=11 // pred_check_branch
        %338 = sbr.rel (%p336) target = $region36
      $region35: #{bert_token_classifier_forward.1} parent=11 // pred_region
        _
      $region36: #{bert_token_classifier_forward.1} parent=11 // pred_fallthru
        _
      // Predicated region
      $region37: #{bert_token_classifier_forward.1} parent=11 // pred_check
        %p339 = pneg %p217
      $region38: #{bert_token_classifier_forward.1} parent=11 // pred_check_branch
        %341 = sbr.rel (%p339) target = $region40
      $region39: #{bert_token_classifier_forward.1} parent=11 // pred_region
        _
      $region40: #{bert_token_classifier_forward.1} parent=11 // pred_fallthru
        _
      // Predicated region
      $region41: #{bert_token_classifier_forward.1} parent=11 // pred_check
        %p342 = pneg %p238
      $region42: #{bert_token_classifier_forward.1} parent=11 // pred_check_branch
        %344 = sbr.rel (%p342) target = $region44
      $region43: #{bert_token_classifier_forward.1} parent=11 // pred_region
        _
      $region44: #{bert_token_classifier_forward.1} parent=11 // pred_fallthru
        _
      // Predicated region
      $region45: #{bert_token_classifier_forward.1} parent=11 // pred_check
        %p345 = pneg %p259
      $region46: #{bert_token_classifier_forward.1} parent=11 // pred_check_branch
        %347 = sbr.rel (%p345) target = $region48
      $region47: #{bert_token_classifier_forward.1} parent=11 // pred_region
        _
      $region48: #{bert_token_classifier_forward.1} parent=11 // pred_fallthru
        _
      // Predicated region
      $region49: #{bert_token_classifier_forward.1} parent=11 // pred_check
        %p348 = pneg %p280
      $region50: #{bert_token_classifier_forward.1} parent=11 // pred_check_branch
        %350 = sbr.rel (%p348) target = $region52
      $region51: #{bert_token_classifier_forward.1} parent=11 // pred_region
        _
      $region52: #{bert_token_classifier_forward.1} parent=11 // pred_fallthru
        _
    $region12: #{bert_token_classifier_forward.1} parent=5 // pred_fallthru
      _
    %p351 = scmp.lt.s32.totalorder %s18, 2
    // Predicated region
    $region53: #{bert_token_classifier_forward.1} parent=5 // pred_check
      %p352 = pneg %p351
    $region54: #{bert_token_classifier_forward.1} parent=5 // pred_check_branch
      %354 = sbr.rel (%p352) target = $region56
    $region55: #{bert_token_classifier_forward.1} parent=5 // pred_region
      // Predicated region
      $region57: #{bert_token_classifier_forward.1} parent=55 // pred_check
        %p355 = pneg %p38
      $region58: #{bert_token_classifier_forward.1} parent=55 // pred_check_branch
        %357 = sbr.rel (%p355) target = $region60
      $region59: #{bert_token_classifier_forward.1} parent=55 // pred_region
        %p358 = scmp.lt.s32.totalorder %s18, 1
        %s359 = scalar_select %p358, %s18, 1
        %s360 = smul.addr %s359, 8
        %s361 = scalar_lea.vmem %s0, %s360
      $region60: #{bert_token_classifier_forward.1} parent=55 // pred_fallthru
        _
      // Predicated region
      $region61: #{bert_token_classifier_forward.1} parent=55 // pred_check
        %p362 = pneg %p64
      $region62: #{bert_token_classifier_forward.1} parent=55 // pred_check_branch
        %364 = sbr.rel (%p362) target = $region64
      $region63: #{bert_token_classifier_forward.1} parent=55 // pred_region
        %p365 = scmp.lt.s32.totalorder %s18, 1
        %s366 = scalar_select %p365, %s18, 1
        %s367 = scalar_lea.vmem %s1, %s366
      $region64: #{bert_token_classifier_forward.1} parent=55 // pred_fallthru
        _
    $region56: #{bert_token_classifier_forward.1} parent=5 // pred_fallthru
      _
    %p368 = scmp.le.s32.totalorder 1, %s18
    %p369 = scmp.lt.s32.totalorder %s18, 3
    %p370 = pnand %p368, %p369
    %p371 = pneg %p370
    // Predicated region
    $region65: #{bert_token_classifier_forward.1} parent=5 // pred_check
      _
    $region66: #{bert_token_classifier_forward.1} parent=5 // pred_check_branch
      %373 = sbr.rel (%p370) target = $region68
    $region67: #{bert_token_classifier_forward.1} parent=5 // pred_region
      %s374 = ssub.s32 %s18, 1
      %p375 = scmp.lt.s32.totalorder %s23, 1
      %s376 = scalar_select %p375, %s23, 1
      %s377 = smul.addr %s376, 8
      %s378 = scalar_lea.vmem %s0, %s377
      %p379 = pneg %p44
      %p380 = pneg %p41
      %p381 = scmp.lt.s32.totalorder %s23, 1
      %s382 = scalar_select %p381, %s23, 1
      %s383 = scalar_lea.vmem %s1, %s382
      %p384 = pneg %p70
      %p385 = pneg %p67
      %p386 = pneg %p91
      %p387 = pneg %p88
      %p388 = pneg %p112
      %p389 = pneg %p109
      %p390 = pneg %p133
      %p391 = pneg %p130
      %p392 = pneg %p154
      %p393 = pneg %p151
      %p394 = pneg %p175
      %p395 = pneg %p172
      %p396 = pneg %p196
      %p397 = pneg %p193
      %p398 = pneg %p217
      %p399 = pneg %p214
      %p400 = pneg %p238
      %p401 = pneg %p235
      %p402 = pneg %p259
      %p403 = pneg %p256
      %p404 = pneg %p280
      %p405 = pneg %p277
      %p406 = pneg %p306
      %p407 = pneg %p303
      %p408 = scmp.lt.s32.totalorder %s23, 1
      %s409 = scalar_select %p408, %s23, 1
      %s410 = smul.addr %s409, 8
      %s411 = scalar_lea.vmem %s12, %s410
      %p412 = scmp.lt.s32.totalorder %s23, 1
      %s413 = scalar_select %p412, %s23, 1
      %s414 = smul.addr %s413, 8
      %s415 = scalar_lea.vmem %s0, %s414
      %p416 = scmp.lt.s32.totalorder %s23, 1
      %s417 = scalar_select %p416, %s23, 1
      %s418 = scalar_lea.vmem %s1, %s417
      %p419 = scmp.lt.s32.totalorder %s23, 1
      %s420 = scalar_select %p419, %s23, 1
      %s421 = smul.addr %s420, 8
      %s422 = scalar_lea.vmem %s12, %s421
      %v423 = vlaneseq
      %v424 = vand.u32 %v423, 127
      %v425 = vld [vmem:[%s415] sm:$0xff]
      %426 = vset.pattern.permute.xlu0 0
      %427 = vperm.xlu0 %426, %v425
      %v428 = vpop.permute.xlu0 %427
      %vm429 = vcmp.eq.s32.totalorder %v424, %v428
      %v430 = vsel %vm429, 1, 0
      %v431 = vcvt.s32.f32 %v430
      %v432 = vld [vmem:[%s2] sm:$0xff]
      %v433 = vld [vmem:[%s2 + $0x8] sm:$0xff]
      %v434 = vld [vmem:[%s2 + $0x10] sm:$0xff]
      %v435 = vld [vmem:[%s2 + $0x18] sm:$0xff]
      %v436 = vld [vmem:[%s2 + $0x20] sm:$0xff]
      %v437 = vld [vmem:[%s2 + $0x28] sm:$0xff]
      %v438 = vld [vmem:[%s2 + $0x30] sm:$0xff]
      %v439 = vld [vmem:[%s2 + $0x38] sm:$0xff]
      %v440 = vld [vmem:[%s2 + $0x40] sm:$0xff]
      %v441 = vld [vmem:[%s2 + $0x48] sm:$0xff]
      %v442 = vld [vmem:[%s2 + $0x50] sm:$0xff]
      %v443 = vld [vmem:[%s2 + $0x58] sm:$0xff]
      %v444 = vld [vmem:[%s2 + $0x60] sm:$0xff]
      %v445 = vld [vmem:[%s2 + $0x68] sm:$0xff]
      %v446 = vld [vmem:[%s2 + $0x70] sm:$0xff]
      %v447 = vld [vmem:[%s2 + $0x78] sm:$0xff]
      %v448 = vld [vmem:[%s3] sm:$0xff]
      %449 = vmatpush.msra.mxu0 %v447
      %450 = vmatpush.msra.mxu0 %v446
      %451 = vmatpush.msra.mxu0 %v445
      %452 = vmatpush.msra.mxu0 %v444
      %453 = vmatpush.msra.mxu0 %v443
      %454 = vmatpush.msra.mxu0 %v442
      %455 = vmatpush.msra.mxu0 %v441
      %456 = vmatpush.msra.mxu0 %v440
      %457 = vmatpush.msra.mxu0 %v439
      %458 = vmatpush.msra.mxu0 %v438
      %459 = vmatpush.msra.mxu0 %v437
      %460 = vmatpush.msra.mxu0 %v436
      %461 = vmatpush.msra.mxu0 %v435
      %462 = vmatpush.msra.mxu0 %v434
      %463 = vmatpush.msra.mxu0 %v433
      %464 = vmatpush.msra.mxu0 %v432
      %465 = vmatmul.f32.gmra.mxu0 %v431
      %v466 = vpop.f32.mrf.mxu0
      %v467 = vadd.f32 %v448, %v466
      %468 = vdwg.mxu0
      %v469 = vld [vmem:[%s4] sm:$0x1]
      %s470 = scalar_lea.vmem %s4, 1
      %v471 = vld [vmem:[%s470] sm:$0x1]
      %vm472 = vcmask 261120
      %v473 = vsel %vm472, %v467, 0.0
      %474 = vadd.xlane.f32.xlu0 %v473
      %v475 = vpop.xlane.xlu0 %474
      %v476 = vrcp.pop 32.0
      %v477 = vmul.f32 32.0, %v476
      %v478 = vsub.f32 1.0, %v477
      %v479 = vmul.f32 %v476, %v478
      %v480 = vadd.f32 %v476, %v479
      %vm481 = vweird.f32 %v476
      %v482 = vsel %vm481, %v476, %v480
      %v483 = vmul.f32 %v475, %v482
      %v484 = vsub.f32 %v467, %v483
      %v485 = vmul.f32 %v484, %v484
      %v486 = vsel %vm472, %v485, 0.0
      %487 = vadd.xlane.f32.xlu0 %v486
      %v488 = vpop.xlane.xlu0 %487
      %v489 = vmul.f32 %v488, %v482
      %v490 = vadd.f32 %v489, 1e-12
      %v491 = vrsqrt.pop %v490
      %v492 = vmul.f32 %v491, %v490
      %v493 = vmul.f32 %v492, %v491
      %v494 = vmul.f32 0.5, %v493
      %v495 = vsub.f32 1.5, %v494
      %v496 = vmul.f32 %v491, %v495
      %vm497 = vweird.f32 %v490
      %vm498 = vweird.f32 %v491
      %vm499 = vmor %vm497, %vm498
      %v500 = vsel %vm499, %v491, %v496
      %v501 = vmul.f32 %v484, %v500
      %v503 = vperm.slane %v469, 0
      %v505 = vmul.f32 %v501, %v503
      %v507 = vperm.slane %v471, 0
      %v509 = vadd.f32 %v505, %v507
      %v510 = vld [vmem:[%s418] sm:$0x1]
      %v511 = vsub.f32 1.0, %v510
      %v512 = vmul.f32 %v511, -10000.0
      %v513 = vld [vmem:[%s5] sm:$0xff]
      %v514 = vld [vmem:[%s5 + $0x8] sm:$0xff]
      %v515 = vld [vmem:[%s5 + $0x10] sm:$0xff]
      %v516 = vld [vmem:[%s5 + $0x18] sm:$0xff]
      %v517 = vld [vmem:[%s5 + $0x20] sm:$0xff]
      %v518 = vld [vmem:[%s5 + $0x28] sm:$0xff]
      %v519 = vld [vmem:[%s5 + $0x30] sm:$0xff]
      %v520 = vld [vmem:[%s5 + $0x38] sm:$0xff]
      %v521 = vld [vmem:[%s5 + $0x40] sm:$0xff]
      %v522 = vld [vmem:[%s5 + $0x48] sm:$0xff]
      %v523 = vld [vmem:[%s5 + $0x50] sm:$0xff]
      %v524 = vld [vmem:[%s5 + $0x58] sm:$0xff]
      %v525 = vld [vmem:[%s5 + $0x60] sm:$0xff]
      %v526 = vld [vmem:[%s5 + $0x68] sm:$0xff]
      %v527 = vld [vmem:[%s5 + $0x70] sm:$0xff]
      %v528 = vld [vmem:[%s5 + $0x78] sm:$0xff]
      %v529 = vld [vmem:[%s5 + $0x80] sm:$0xff]
      %v530 = vld [vmem:[%s5 + $0x88] sm:$0xff]
      %v531 = vld [vmem:[%s5 + $0x90] sm:$0xff]
      %v532 = vld [vmem:[%s5 + $0x98] sm:$0xff]
      %v533 = vld [vmem:[%s5 + $0xa0] sm:$0xff]
      %v534 = vld [vmem:[%s5 + $0xa8] sm:$0xff]
      %v535 = vld [vmem:[%s5 + $0xb0] sm:$0xff]
      %v536 = vld [vmem:[%s5 + $0xb8] sm:$0xff]
      %v537 = vld [vmem:[%s5 + $0xc0] sm:$0xff]
      %v538 = vld [vmem:[%s5 + $0xc8] sm:$0xff]
      %v539 = vld [vmem:[%s5 + $0xd0] sm:$0xff]
      %v540 = vld [vmem:[%s5 + $0xd8] sm:$0xff]
      %v541 = vld [vmem:[%s5 + $0xe0] sm:$0xff]
      %v542 = vld [vmem:[%s5 + $0xe8] sm:$0xff]
      %v543 = vld [vmem:[%s5 + $0xf0] sm:$0xff]
      %v544 = vld [vmem:[%s5 + $0xf8] sm:$0xff]
      %v545 = vld [vmem:[%s5 + $0x100] sm:$0xff]
      %v546 = vld [vmem:[%s5 + $0x108] sm:$0xff]
      %v547 = vld [vmem:[%s5 + $0x110] sm:$0xff]
      %v548 = vld [vmem:[%s5 + $0x118] sm:$0xff]
      %v549 = vld [vmem:[%s5 + $0x120] sm:$0xff]
      %v550 = vld [vmem:[%s5 + $0x128] sm:$0xff]
      %v551 = vld [vmem:[%s5 + $0x130] sm:$0xff]
      %v552 = vld [vmem:[%s5 + $0x138] sm:$0xff]
      %v553 = vld [vmem:[%s5 + $0x140] sm:$0xff]
      %v554 = vld [vmem:[%s5 + $0x148] sm:$0xff]
      %v555 = vld [vmem:[%s5 + $0x150] sm:$0xff]
      %v556 = vld [vmem:[%s5 + $0x158] sm:$0xff]
      %v557 = vld [vmem:[%s5 + $0x160] sm:$0xff]
      %v558 = vld [vmem:[%s5 + $0x168] sm:$0xff]
      %v559 = vld [vmem:[%s5 + $0x170] sm:$0xff]
      %v560 = vld [vmem:[%s5 + $0x178] sm:$0xff]
      %v561 = vld [vmem:[%s6] sm:$0x1]
      %v562 = vld [vmem:[%s6 + $0x1] sm:$0x1]
      %v563 = vld [vmem:[%s6 + $0x2] sm:$0x1]
      %v564 = vld [vmem:[%s6 + $0x3] sm:$0x1]
      %v565 = vld [vmem:[%s6 + $0x4] sm:$0x1]
      %v566 = vld [vmem:[%s6 + $0x5] sm:$0x1]
      %v567 = vld [vmem:[%s6 + $0x6] sm:$0x1]
      %v568 = vld [vmem:[%s6 + $0x7] sm:$0x1]
      %v569 = vld [vmem:[%s6 + $0x8] sm:$0x1]
      %v570 = vld [vmem:[%s6 + $0x9] sm:$0x1]
      %v571 = vld [vmem:[%s6 + $0xa] sm:$0x1]
      %v572 = vld [vmem:[%s6 + $0xb] sm:$0x1]
      %v585 = vperm.slane %v561, 0
      %v586 = vperm.slane %v562, 0
      %v587 = vperm.slane %v563, 0
      %v588 = vperm.slane %v564, 0
      %v589 = vperm.slane %v565, 0
      %v590 = vperm.slane %v566, 0
      %v591 = vperm.slane %v567, 0
      %v592 = vperm.slane %v568, 0
      %v593 = vperm.slane %v569, 0
      %v594 = vperm.slane %v570, 0
      %v595 = vperm.slane %v571, 0
      %v596 = vperm.slane %v572, 0
      %v610 = vsel %vm472, %v509, 0
      %612 = vmatpush.msra.mxu0 0.0
      %613 = vmatpush.msra.mxu0 0.0
      %614 = vmatpush.msra.mxu0 0.0
      %615 = vmatpush.msra.mxu0 0.0
      %616 = vmatpush.msra.mxu0 0.0
      %617 = vmatpush.msra.mxu0 0.0
      %618 = vmatpush.msra.mxu0 0.0
      %619 = vmatpush.msra.mxu0 0.0
      %620 = vmatpush.msra.mxu0 0.0
      %621 = vmatpush.msra.mxu0 0.0
      %622 = vmatpush.msra.mxu0 0.0
      %623 = vmatpush.msra.mxu0 0.0
      %624 = vmatpush.msra.mxu0 %v516
      %625 = vmatpush.msra.mxu0 %v515
      %626 = vmatpush.msra.mxu0 %v514
      %627 = vmatpush.msra.mxu0 %v513
      %628 = vmatmul.f32.gmra.mxu0 %v610
      %v629 = vpop.f32.mrf.mxu0
      %v630 = vadd.f32 %v585, %v629
      %631 = vdwg.mxu0
      %632 = vmatpush.msra.mxu0 0.0
      %633 = vmatpush.msra.mxu0 0.0
      %634 = vmatpush.msra.mxu0 0.0
      %635 = vmatpush.msra.mxu0 0.0
      %636 = vmatpush.msra.mxu0 0.0
      %637 = vmatpush.msra.mxu0 0.0
      %638 = vmatpush.msra.mxu0 0.0
      %639 = vmatpush.msra.mxu0 0.0
      %640 = vmatpush.msra.mxu0 0.0
      %641 = vmatpush.msra.mxu0 0.0
      %642 = vmatpush.msra.mxu0 0.0
      %643 = vmatpush.msra.mxu0 0.0
      %644 = vmatpush.msra.mxu0 %v520
      %645 = vmatpush.msra.mxu0 %v519
      %646 = vmatpush.msra.mxu0 %v518
      %647 = vmatpush.msra.mxu0 %v517
      %648 = vmatmul.f32.gmra.mxu0 %v610
      %v649 = vpop.f32.mrf.mxu0
      %v650 = vadd.f32 %v586, %v649
      %651 = vdwg.mxu0
      %652 = vmatpush.msra.mxu0 0.0
      %653 = vmatpush.msra.mxu0 0.0
      %654 = vmatpush.msra.mxu0 0.0
      %655 = vmatpush.msra.mxu0 0.0
      %656 = vmatpush.msra.mxu0 0.0
      %657 = vmatpush.msra.mxu0 0.0
      %658 = vmatpush.msra.mxu0 0.0
      %659 = vmatpush.msra.mxu0 0.0
      %660 = vmatpush.msra.mxu0 0.0
      %661 = vmatpush.msra.mxu0 0.0
      %662 = vmatpush.msra.mxu0 0.0
      %663 = vmatpush.msra.mxu0 0.0
      %664 = vmatpush.msra.mxu0 %v524
      %665 = vmatpush.msra.mxu0 %v523
      %666 = vmatpush.msra.mxu0 %v522
      %667 = vmatpush.msra.mxu0 %v521
      %668 = vmatmul.f32.gmra.mxu0 %v610
      %v669 = vpop.f32.mrf.mxu0
      %v670 = vadd.f32 %v587, %v669
      %671 = vdwg.mxu0
      %672 = vmatpush.msra.mxu0 0.0
      %673 = vmatpush.msra.mxu0 0.0
      %674 = vmatpush.msra.mxu0 0.0
      %675 = vmatpush.msra.mxu0 0.0
      %676 = vmatpush.msra.mxu0 0.0
      %677 = vmatpush.msra.mxu0 0.0
      %678 = vmatpush.msra.mxu0 0.0
      %679 = vmatpush.msra.mxu0 0.0
      %680 = vmatpush.msra.mxu0 0.0
      %681 = vmatpush.msra.mxu0 0.0
      %682 = vmatpush.msra.mxu0 0.0
      %683 = vmatpush.msra.mxu0 0.0
      %684 = vmatpush.msra.mxu0 %v528
      %685 = vmatpush.msra.mxu0 %v527
      %686 = vmatpush.msra.mxu0 %v526
      %687 = vmatpush.msra.mxu0 %v525
      %688 = vmatmul.f32.gmra.mxu0 %v610
      %v689 = vpop.f32.mrf.mxu0
      %v690 = vadd.f32 %v588, %v689
      %691 = vdwg.mxu0
      %692 = vmatpush.msra.mxu0 0.0
      %693 = vmatpush.msra.mxu0 0.0
      %694 = vmatpush.msra.mxu0 0.0
      %695 = vmatpush.msra.mxu0 0.0
      %696 = vmatpush.msra.mxu0 0.0
      %697 = vmatpush.msra.mxu0 0.0
      %698 = vmatpush.msra.mxu0 0.0
      %699 = vmatpush.msra.mxu0 0.0
      %700 = vmatpush.msra.mxu0 0.0
      %701 = vmatpush.msra.mxu0 0.0
      %702 = vmatpush.msra.mxu0 0.0
      %703 = vmatpush.msra.mxu0 0.0
      %704 = vmatpush.msra.mxu0 %v532
      %705 = vmatpush.msra.mxu0 %v531
      %706 = vmatpush.msra.mxu0 %v530
      %707 = vmatpush.msra.mxu0 %v529
      %708 = vmatmul.f32.gmra.mxu0 %v610
      %v709 = vpop.f32.mrf.mxu0
      %v710 = vadd.f32 %v589, %v709
      %711 = vdwg.mxu0
      %712 = vmatpush.msra.mxu0 0.0
      %713 = vmatpush.msra.mxu0 0.0
      %714 = vmatpush.msra.mxu0 0.0
      %715 = vmatpush.msra.mxu0 0.0
      %716 = vmatpush.msra.mxu0 0.0
      %717 = vmatpush.msra.mxu0 0.0
      %718 = vmatpush.msra.mxu0 0.0
      %719 = vmatpush.msra.mxu0 0.0
      %720 = vmatpush.msra.mxu0 0.0
      %721 = vmatpush.msra.mxu0 0.0
      %722 = vmatpush.msra.mxu0 0.0
      %723 = vmatpush.msra.mxu0 0.0
      %724 = vmatpush.msra.mxu0 %v536
      %725 = vmatpush.msra.mxu0 %v535
      %726 = vmatpush.msra.mxu0 %v534
      %727 = vmatpush.msra.mxu0 %v533
      %728 = vmatmul.f32.gmra.mxu0 %v610
      %v729 = vpop.f32.mrf.mxu0
      %v730 = vadd.f32 %v590, %v729
      %731 = vdwg.mxu0
      %732 = vmatpush.msra.mxu0 0.0
      %733 = vmatpush.msra.mxu0 0.0
      %734 = vmatpush.msra.mxu0 0.0
      %735 = vmatpush.msra.mxu0 0.0
      %736 = vmatpush.msra.mxu0 0.0
      %737 = vmatpush.msra.mxu0 0.0
      %738 = vmatpush.msra.mxu0 0.0
      %739 = vmatpush.msra.mxu0 0.0
      %740 = vmatpush.msra.mxu0 0.0
      %741 = vmatpush.msra.mxu0 0.0
      %742 = vmatpush.msra.mxu0 0.0
      %743 = vmatpush.msra.mxu0 0.0
      %744 = vmatpush.msra.mxu0 %v540
      %745 = vmatpush.msra.mxu0 %v539
      %746 = vmatpush.msra.mxu0 %v538
      %747 = vmatpush.msra.mxu0 %v537
      %748 = vmatmul.f32.gmra.mxu0 %v610
      %v749 = vpop.f32.mrf.mxu0
      %v750 = vadd.f32 %v591, %v749
      %751 = vdwg.mxu0
      %752 = vmatpush.msra.mxu0 0.0
      %753 = vmatpush.msra.mxu0 0.0
      %754 = vmatpush.msra.mxu0 0.0
      %755 = vmatpush.msra.mxu0 0.0
      %756 = vmatpush.msra.mxu0 0.0
      %757 = vmatpush.msra.mxu0 0.0
      %758 = vmatpush.msra.mxu0 0.0
      %759 = vmatpush.msra.mxu0 0.0
      %760 = vmatpush.msra.mxu0 0.0
      %761 = vmatpush.msra.mxu0 0.0
      %762 = vmatpush.msra.mxu0 0.0
      %763 = vmatpush.msra.mxu0 0.0
      %764 = vmatpush.msra.mxu0 %v544
      %765 = vmatpush.msra.mxu0 %v543
      %766 = vmatpush.msra.mxu0 %v542
      %767 = vmatpush.msra.mxu0 %v541
      %768 = vmatmul.f32.gmra.mxu0 %v610
      %v769 = vpop.f32.mrf.mxu0
      %v770 = vadd.f32 %v592, %v769
      %771 = vdwg.mxu0
      %772 = vmatpush.msra.mxu0 0.0
      %773 = vmatpush.msra.mxu0 0.0
      %774 = vmatpush.msra.mxu0 0.0
      %775 = vmatpush.msra.mxu0 0.0
      %776 = vmatpush.msra.mxu0 0.0
      %777 = vmatpush.msra.mxu0 0.0
      %778 = vmatpush.msra.mxu0 0.0
      %779 = vmatpush.msra.mxu0 0.0
      %780 = vmatpush.msra.mxu0 0.0
      %781 = vmatpush.msra.mxu0 0.0
      %782 = vmatpush.msra.mxu0 0.0
      %783 = vmatpush.msra.mxu0 0.0
      %784 = vmatpush.msra.mxu0 %v548
      %785 = vmatpush.msra.mxu0 %v547
      %786 = vmatpush.msra.mxu0 %v546
      %787 = vmatpush.msra.mxu0 %v545
      %788 = vmatmul.f32.gmra.mxu0 %v610
      %v789 = vpop.f32.mrf.mxu0
      %v790 = vadd.f32 %v593, %v789
      %791 = vdwg.mxu0
      %792 = vmatpush.msra.mxu0 0.0
      %793 = vmatpush.msra.mxu0 0.0
      %794 = vmatpush.msra.mxu0 0.0
      %795 = vmatpush.msra.mxu0 0.0
      %796 = vmatpush.msra.mxu0 0.0
      %797 = vmatpush.msra.mxu0 0.0
      %798 = vmatpush.msra.mxu0 0.0
      %799 = vmatpush.msra.mxu0 0.0
      %800 = vmatpush.msra.mxu0 0.0
      %801 = vmatpush.msra.mxu0 0.0
      %802 = vmatpush.msra.mxu0 0.0
      %803 = vmatpush.msra.mxu0 0.0
      %804 = vmatpush.msra.mxu0 %v552
      %805 = vmatpush.msra.mxu0 %v551
      %806 = vmatpush.msra.mxu0 %v550
      %807 = vmatpush.msra.mxu0 %v549
      %808 = vmatmul.f32.gmra.mxu0 %v610
      %v809 = vpop.f32.mrf.mxu0
      %v810 = vadd.f32 %v594, %v809
      %811 = vdwg.mxu0
      %812 = vmatpush.msra.mxu0 0.0
      %813 = vmatpush.msra.mxu0 0.0
      %814 = vmatpush.msra.mxu0 0.0
      %815 = vmatpush.msra.mxu0 0.0
      %816 = vmatpush.msra.mxu0 0.0
      %817 = vmatpush.msra.mxu0 0.0
      %818 = vmatpush.msra.mxu0 0.0
      %819 = vmatpush.msra.mxu0 0.0
      %820 = vmatpush.msra.mxu0 0.0
      %821 = vmatpush.msra.mxu0 0.0
      %822 = vmatpush.msra.mxu0 0.0
      %823 = vmatpush.msra.mxu0 0.0
      %824 = vmatpush.msra.mxu0 %v556
      %825 = vmatpush.msra.mxu0 %v555
      %826 = vmatpush.msra.mxu0 %v554
      %827 = vmatpush.msra.mxu0 %v553
      %828 = vmatmul.f32.gmra.mxu0 %v610
      %v829 = vpop.f32.mrf.mxu0
      %v830 = vadd.f32 %v595, %v829
      %831 = vdwg.mxu0
      %832 = vmatpush.msra.mxu0 0.0
      %833 = vmatpush.msra.mxu0 0.0
      %834 = vmatpush.msra.mxu0 0.0
      %835 = vmatpush.msra.mxu0 0.0
      %836 = vmatpush.msra.mxu0 0.0
      %837 = vmatpush.msra.mxu0 0.0
      %838 = vmatpush.msra.mxu0 0.0
      %839 = vmatpush.msra.mxu0 0.0
      %840 = vmatpush.msra.mxu0 0.0
      %841 = vmatpush.msra.mxu0 0.0
      %842 = vmatpush.msra.mxu0 0.0
      %843 = vmatpush.msra.mxu0 0.0
      %844 = vmatpush.msra.mxu0 %v560
      %845 = vmatpush.msra.mxu0 %v559
      %846 = vmatpush.msra.mxu0 %v558
      %847 = vmatpush.msra.mxu0 %v557
      %848 = vmatmul.f32.gmra.mxu0 %v610
      %v849 = vpop.f32.mrf.mxu0
      %v850 = vadd.f32 %v596, %v849
      %851 = vdwg.mxu0
      %v853 = vperm.slane %v512, 0
      %vm855 = vcmask 64512
      %v857 = vsel %vm855, %v630, 0
      %v860 = vsel %vm855, %v710, 0
      %862 = vmatpush.xpose.msra.mxu0 0.0
      %863 = vmatpush.xpose.msra.mxu0 0.0
      %864 = vmatpush.xpose.msra.mxu0 0.0
      %865 = vmatpush.xpose.msra.mxu0 0.0
      %866 = vmatpush.xpose.msra.mxu0 0.0
      %867 = vmatpush.xpose.msra.mxu0 0.0
      %868 = vmatpush.xpose.msra.mxu0 0.0
      %869 = vmatpush.xpose.msra.mxu0 0.0
      %870 = vmatpush.xpose.msra.mxu0 0.0
      %871 = vmatpush.xpose.msra.mxu0 0.0
      %872 = vmatpush.xpose.msra.mxu0 0.0
      %873 = vmatpush.xpose.msra.mxu0 0.0
      %874 = vmatpush.xpose.msra.mxu0 0.0
      %875 = vmatpush.xpose.msra.mxu0 0.0
      %876 = vmatpush.xpose.msra.mxu0 0.0
      %877 = vmatpush.xpose.msra.mxu0 %v860
      %878 = vmatmul.f32.gmra.mxu0 %v857
      %v879 = vpop.f32.mrf.mxu0
      %v880 = vadd.f32 %v853, %v879
      %881 = vdwg.mxu0
      %v883 = vsel %vm855, %v650, 0
      %v886 = vsel %vm855, %v730, 0
      %888 = vmatpush.xpose.msra.mxu0 0.0
      %889 = vmatpush.xpose.msra.mxu0 0.0
      %890 = vmatpush.xpose.msra.mxu0 0.0
      %891 = vmatpush.xpose.msra.mxu0 0.0
      %892 = vmatpush.xpose.msra.mxu0 0.0
      %893 = vmatpush.xpose.msra.mxu0 0.0
      %894 = vmatpush.xpose.msra.mxu0 0.0
      %895 = vmatpush.xpose.msra.mxu0 0.0
      %896 = vmatpush.xpose.msra.mxu0 0.0
      %897 = vmatpush.xpose.msra.mxu0 0.0
      %898 = vmatpush.xpose.msra.mxu0 0.0
      %899 = vmatpush.xpose.msra.mxu0 0.0
      %900 = vmatpush.xpose.msra.mxu0 0.0
      %901 = vmatpush.xpose.msra.mxu0 0.0
      %902 = vmatpush.xpose.msra.mxu0 0.0
      %903 = vmatpush.xpose.msra.mxu0 %v886
      %904 = vmatmul.f32.gmra.mxu0 %v883
      %v905 = vpop.f32.mrf.mxu0
      %v906 = vadd.f32 %v853, %v905
      %907 = vdwg.mxu0
      %v909 = vsel %vm855, %v670, 0
      %v912 = vsel %vm855, %v750, 0
      %914 = vmatpush.xpose.msra.mxu0 0.0
      %915 = vmatpush.xpose.msra.mxu0 0.0
      %916 = vmatpush.xpose.msra.mxu0 0.0
      %917 = vmatpush.xpose.msra.mxu0 0.0
      %918 = vmatpush.xpose.msra.mxu0 0.0
      %919 = vmatpush.xpose.msra.mxu0 0.0
      %920 = vmatpush.xpose.msra.mxu0 0.0
      %921 = vmatpush.xpose.msra.mxu0 0.0
      %922 = vmatpush.xpose.msra.mxu0 0.0
      %923 = vmatpush.xpose.msra.mxu0 0.0
      %924 = vmatpush.xpose.msra.mxu0 0.0
      %925 = vmatpush.xpose.msra.mxu0 0.0
      %926 = vmatpush.xpose.msra.mxu0 0.0
      %927 = vmatpush.xpose.msra.mxu0 0.0
      %928 = vmatpush.xpose.msra.mxu0 0.0
      %929 = vmatpush.xpose.msra.mxu0 %v912
      %930 = vmatmul.f32.gmra.mxu0 %v909
      %v931 = vpop.f32.mrf.mxu0
      %v932 = vadd.f32 %v853, %v931
      %933 = vdwg.mxu0
      %v935 = vsel %vm855, %v690, 0
      %v938 = vsel %vm855, %v770, 0
      %940 = vmatpush.xpose.msra.mxu0 0.0
      %941 = vmatpush.xpose.msra.mxu0 0.0
      %942 = vmatpush.xpose.msra.mxu0 0.0
      %943 = vmatpush.xpose.msra.mxu0 0.0
      %944 = vmatpush.xpose.msra.mxu0 0.0
      %945 = vmatpush.xpose.msra.mxu0 0.0
      %946 = vmatpush.xpose.msra.mxu0 0.0
      %947 = vmatpush.xpose.msra.mxu0 0.0
      %948 = vmatpush.xpose.msra.mxu0 0.0
      %949 = vmatpush.xpose.msra.mxu0 0.0
      %950 = vmatpush.xpose.msra.mxu0 0.0
      %951 = vmatpush.xpose.msra.mxu0 0.0
      %952 = vmatpush.xpose.msra.mxu0 0.0
      %953 = vmatpush.xpose.msra.mxu0 0.0
      %954 = vmatpush.xpose.msra.mxu0 0.0
      %955 = vmatpush.xpose.msra.mxu0 %v938
      %956 = vmatmul.f32.gmra.mxu0 %v935
      %v957 = vpop.f32.mrf.mxu0
      %v958 = vadd.f32 %v853, %v957
      %959 = vdwg.mxu0
      %v960 = vsel %vm855, %v880, -inf
      %961 = vmax.xlane.f32.xlu0 %v960
      %v962 = vpop.xlane.xlu0 %961
      %v963 = vsel %vm855, %v906, -inf
      %964 = vmax.xlane.f32.xlu0 %v963
      %v965 = vpop.xlane.xlu0 %964
      %v966 = vsel %vm855, %v932, -inf
      %967 = vmax.xlane.f32.xlu0 %v966
      %v968 = vpop.xlane.xlu0 %967
      %v969 = vsel %vm855, %v958, -inf
      %970 = vmax.xlane.f32.xlu0 %v969
      %v971 = vpop.xlane.xlu0 %970
      %v972 = vsub.f32 %v880, %v962
      %v973 = vsub.f32 %v906, %v965
      %v974 = vsub.f32 %v932, %v968
      %v975 = vsub.f32 %v958, %v971
      %v976 = vmul.f32 %v972, 1.442695
      %v977 = vpow.pop %v976
      %v978 = vmul.f32 %v973, 1.442695
      %v979 = vpow.pop %v978
      %v980 = vmul.f32 %v974, 1.442695
      %v981 = vpow.pop %v980
      %v982 = vmul.f32 %v975, 1.442695
      %v983 = vpow.pop %v982
      %v984 = vsel %vm855, %v977, 0.0
      %985 = vadd.xlane.f32.xlu0 %v984
      %v986 = vpop.xlane.xlu0 %985
      %v987 = vsel %vm855, %v979, 0.0
      %988 = vadd.xlane.f32.xlu0 %v987
      %v989 = vpop.xlane.xlu0 %988
      %v990 = vsel %vm855, %v981, 0.0
      %991 = vadd.xlane.f32.xlu0 %v990
      %v992 = vpop.xlane.xlu0 %991
      %v993 = vsel %vm855, %v983, 0.0
      %994 = vadd.xlane.f32.xlu0 %v993
      %v995 = vpop.xlane.xlu0 %994
      %v996 = vrcp.pop %v986
      %v997 = vmul.f32 %v986, %v996
      %v998 = vsub.f32 1.0, %v997
      %v999 = vmul.f32 %v996, %v998
      %v1000 = vadd.f32 %v996, %v999
      %vm1001 = vweird.f32 %v986
      %vm1002 = vweird.f32 %v996
      %vm1003 = vmor %vm1001, %vm1002
      %v1004 = vsel %vm1003, %v996, %v1000
      %v1005 = vand.u32 2147483647, %v986
      %vm1006 = vcmp.eq.f32.partialorder %v1005, 8.507059e+37
      %v1007 = vand.u32 %v986, 2147483648
      %v1008 = vor.u32 1.1754944e-38, %v1007
      %v1009 = vsel %vm1006, %v1008, %v1004
      %v1010 = vmul.f32 %v977, %v1009
      %v1011 = vrcp.pop %v989
      %v1012 = vmul.f32 %v989, %v1011
      %v1013 = vsub.f32 1.0, %v1012
      %v1014 = vmul.f32 %v1011, %v1013
      %v1015 = vadd.f32 %v1011, %v1014
      %vm1016 = vweird.f32 %v989
      %vm1017 = vweird.f32 %v1011
      %vm1018 = vmor %vm1016, %vm1017
      %v1019 = vsel %vm1018, %v1011, %v1015
      %v1020 = vand.u32 2147483647, %v989
      %vm1021 = vcmp.eq.f32.partialorder %v1020, 8.507059e+37
      %v1022 = vand.u32 %v989, 2147483648
      %v1023 = vor.u32 1.1754944e-38, %v1022
      %v1024 = vsel %vm1021, %v1023, %v1019
      %v1025 = vmul.f32 %v979, %v1024
      %v1026 = vrcp.pop %v992
      %v1027 = vmul.f32 %v992, %v1026
      %v1028 = vsub.f32 1.0, %v1027
      %v1029 = vmul.f32 %v1026, %v1028
      %v1030 = vadd.f32 %v1026, %v1029
      %vm1031 = vweird.f32 %v992
      %vm1032 = vweird.f32 %v1026
      %vm1033 = vmor %vm1031, %vm1032
      %v1034 = vsel %vm1033, %v1026, %v1030
      %v1035 = vand.u32 2147483647, %v992
      %vm1036 = vcmp.eq.f32.partialorder %v1035, 8.507059e+37
      %v1037 = vand.u32 %v992, 2147483648
      %v1038 = vor.u32 1.1754944e-38, %v1037
      %v1039 = vsel %vm1036, %v1038, %v1034
      %v1040 = vmul.f32 %v981, %v1039
      %v1041 = vrcp.pop %v995
      %v1042 = vmul.f32 %v995, %v1041
      %v1043 = vsub.f32 1.0, %v1042
      %v1044 = vmul.f32 %v1041, %v1043
      %v1045 = vadd.f32 %v1041, %v1044
      %vm1046 = vweird.f32 %v995
      %vm1047 = vweird.f32 %v1041
      %vm1048 = vmor %vm1046, %vm1047
      %v1049 = vsel %vm1048, %v1041, %v1045
      %v1050 = vand.u32 2147483647, %v995
      %vm1051 = vcmp.eq.f32.partialorder %v1050, 8.507059e+37
      %v1052 = vand.u32 %v995, 2147483648
      %v1053 = vor.u32 1.1754944e-38, %v1052
      %v1054 = vsel %vm1051, %v1053, %v1049
      %v1055 = vmul.f32 %v983, %v1054
      %v1057 = vsel %vm855, %v1010, 0
      %1059 = vmatpush.msra.mxu0 0.0
      %1060 = vmatpush.msra.mxu0 0.0
      %1061 = vmatpush.msra.mxu0 0.0
      %1062 = vmatpush.msra.mxu0 0.0
      %1063 = vmatpush.msra.mxu0 0.0
      %1064 = vmatpush.msra.mxu0 0.0
      %1065 = vmatpush.msra.mxu0 0.0
      %1066 = vmatpush.msra.mxu0 0.0
      %1067 = vmatpush.msra.mxu0 0.0
      %1068 = vmatpush.msra.mxu0 0.0
      %1069 = vmatpush.msra.mxu0 0.0
      %1070 = vmatpush.msra.mxu0 0.0
      %1071 = vmatpush.msra.mxu0 0.0
      %1072 = vmatpush.msra.mxu0 0.0
      %1073 = vmatpush.msra.mxu0 0.0
      %1074 = vmatpush.msra.mxu0 %v790
      %1075 = vmatmul.f32.gmra.mxu0 %v1057
      %v1076 = vpop.f32.mrf.mxu0
      %v1077 = vadd.f32 0.0, %v1076
      %1078 = vdwg.mxu0
      %v1080 = vsel %vm855, %v1025, 0
      %1082 = vmatpush.msra.mxu0 0.0
      %1083 = vmatpush.msra.mxu0 0.0
      %1084 = vmatpush.msra.mxu0 0.0
      %1085 = vmatpush.msra.mxu0 0.0
      %1086 = vmatpush.msra.mxu0 0.0
      %1087 = vmatpush.msra.mxu0 0.0
      %1088 = vmatpush.msra.mxu0 0.0
      %1089 = vmatpush.msra.mxu0 0.0
      %1090 = vmatpush.msra.mxu0 0.0
      %1091 = vmatpush.msra.mxu0 0.0
      %1092 = vmatpush.msra.mxu0 0.0
      %1093 = vmatpush.msra.mxu0 0.0
      %1094 = vmatpush.msra.mxu0 0.0
      %1095 = vmatpush.msra.mxu0 0.0
      %1096 = vmatpush.msra.mxu0 0.0
      %1097 = vmatpush.msra.mxu0 %v810
      %1098 = vmatmul.f32.gmra.mxu0 %v1080
      %v1099 = vpop.f32.mrf.mxu0
      %v1100 = vadd.f32 0.0, %v1099
      %1101 = vdwg.mxu0
      %v1103 = vsel %vm855, %v1040, 0
      %1105 = vmatpush.msra.mxu0 0.0
      %1106 = vmatpush.msra.mxu0 0.0
      %1107 = vmatpush.msra.mxu0 0.0
      %1108 = vmatpush.msra.mxu0 0.0
      %1109 = vmatpush.msra.mxu0 0.0
      %1110 = vmatpush.msra.mxu0 0.0
      %1111 = vmatpush.msra.mxu0 0.0
      %1112 = vmatpush.msra.mxu0 0.0
      %1113 = vmatpush.msra.mxu0 0.0
      %1114 = vmatpush.msra.mxu0 0.0
      %1115 = vmatpush.msra.mxu0 0.0
      %1116 = vmatpush.msra.mxu0 0.0
      %1117 = vmatpush.msra.mxu0 0.0
      %1118 = vmatpush.msra.mxu0 0.0
      %1119 = vmatpush.msra.mxu0 0.0
      %1120 = vmatpush.msra.mxu0 %v830
      %1121 = vmatmul.f32.gmra.mxu0 %v1103
      %v1122 = vpop.f32.mrf.mxu0
      %v1123 = vadd.f32 0.0, %v1122
      %1124 = vdwg.mxu0
      %v1126 = vsel %vm855, %v1055, 0
      %1128 = vmatpush.msra.mxu0 0.0
      %1129 = vmatpush.msra.mxu0 0.0
      %1130 = vmatpush.msra.mxu0 0.0
      %1131 = vmatpush.msra.mxu0 0.0
      %1132 = vmatpush.msra.mxu0 0.0
      %1133 = vmatpush.msra.mxu0 0.0
      %1134 = vmatpush.msra.mxu0 0.0
      %1135 = vmatpush.msra.mxu0 0.0
      %1136 = vmatpush.msra.mxu0 0.0
      %1137 = vmatpush.msra.mxu0 0.0
      %1138 = vmatpush.msra.mxu0 0.0
      %1139 = vmatpush.msra.mxu0 0.0
      %1140 = vmatpush.msra.mxu0 0.0
      %1141 = vmatpush.msra.mxu0 0.0
      %1142 = vmatpush.msra.mxu0 0.0
      %1143 = vmatpush.msra.mxu0 %v850
      %1144 = vmatmul.f32.gmra.mxu0 %v1126
      %v1145 = vpop.f32.mrf.mxu0
      %v1146 = vadd.f32 0.0, %v1145
      %1147 = vdwg.mxu0
      %v1148 = vld [vmem:[%s7] sm:$0xff]
      %v1149 = vld [vmem:[%s7 + $0x8] sm:$0xff]
      %v1150 = vld [vmem:[%s7 + $0x10] sm:$0xff]
      %v1151 = vld [vmem:[%s7 + $0x18] sm:$0xff]
      %v1153 = vsel %vm855, %v1077, 0
      %1155 = vmatpush.msra.mxu0 0.0
      %1156 = vmatpush.msra.mxu0 0.0
      %1157 = vmatpush.msra.mxu0 0.0
      %1158 = vmatpush.msra.mxu0 0.0
      %1159 = vmatpush.msra.mxu0 0.0
      %1160 = vmatpush.msra.mxu0 0.0
      %1161 = vmatpush.msra.mxu0 0.0
      %1162 = vmatpush.msra.mxu0 0.0
      %1163 = vmatpush.msra.mxu0 0.0
      %1164 = vmatpush.msra.mxu0 0.0
      %1165 = vmatpush.msra.mxu0 0.0
      %1166 = vmatpush.msra.mxu0 0.0
      %1167 = vmatpush.msra.mxu0 0.0
      %1168 = vmatpush.msra.mxu0 0.0
      %1169 = vmatpush.msra.mxu0 0.0
      %1170 = vmatpush.msra.mxu0 %v1148
      %1171 = vmatmul.f32.gmra.mxu0 %v1153
      %v1172 = vpop.f32.mrf.mxu0
      %v1173 = vadd.f32 0.0, %v1172
      %1174 = vdwg.mxu0
      %v1176 = vsel %vm855, %v1100, 0
      %1178 = vmatpush.msra.mxu0 0.0
      %1179 = vmatpush.msra.mxu0 0.0
      %1180 = vmatpush.msra.mxu0 0.0
      %1181 = vmatpush.msra.mxu0 0.0
      %1182 = vmatpush.msra.mxu0 0.0
      %1183 = vmatpush.msra.mxu0 0.0
      %1184 = vmatpush.msra.mxu0 0.0
      %1185 = vmatpush.msra.mxu0 0.0
      %1186 = vmatpush.msra.mxu0 0.0
      %1187 = vmatpush.msra.mxu0 0.0
      %1188 = vmatpush.msra.mxu0 0.0
      %1189 = vmatpush.msra.mxu0 0.0
      %1190 = vmatpush.msra.mxu0 0.0
      %1191 = vmatpush.msra.mxu0 0.0
      %1192 = vmatpush.msra.mxu0 0.0
      %1193 = vmatpush.msra.mxu0 %v1149
      %1194 = vmatmul.f32.gmra.mxu0 %v1176
      %v1195 = vpop.f32.mrf.mxu0
      %v1196 = vadd.f32 0.0, %v1195
      %1197 = vdwg.mxu0
      %v1199 = vsel %vm855, %v1123, 0
      %1201 = vmatpush.msra.mxu0 0.0
      %1202 = vmatpush.msra.mxu0 0.0
      %1203 = vmatpush.msra.mxu0 0.0
      %1204 = vmatpush.msra.mxu0 0.0
      %1205 = vmatpush.msra.mxu0 0.0
      %1206 = vmatpush.msra.mxu0 0.0
      %1207 = vmatpush.msra.mxu0 0.0
      %1208 = vmatpush.msra.mxu0 0.0
      %1209 = vmatpush.msra.mxu0 0.0
      %1210 = vmatpush.msra.mxu0 0.0
      %1211 = vmatpush.msra.mxu0 0.0
      %1212 = vmatpush.msra.mxu0 0.0
      %1213 = vmatpush.msra.mxu0 0.0
      %1214 = vmatpush.msra.mxu0 0.0
      %1215 = vmatpush.msra.mxu0 0.0
      %1216 = vmatpush.msra.mxu0 %v1150
      %1217 = vmatmul.f32.gmra.mxu0 %v1199
      %v1218 = vpop.f32.mrf.mxu0
      %v1219 = vadd.f32 0.0, %v1218
      %1220 = vdwg.mxu0
      %v1222 = vsel %vm855, %v1146, 0
      %1224 = vmatpush.msra.mxu0 0.0
      %1225 = vmatpush.msra.mxu0 0.0
      %1226 = vmatpush.msra.mxu0 0.0
      %1227 = vmatpush.msra.mxu0 0.0
      %1228 = vmatpush.msra.mxu0 0.0
      %1229 = vmatpush.msra.mxu0 0.0
      %1230 = vmatpush.msra.mxu0 0.0
      %1231 = vmatpush.msra.mxu0 0.0
      %1232 = vmatpush.msra.mxu0 0.0
      %1233 = vmatpush.msra.mxu0 0.0
      %1234 = vmatpush.msra.mxu0 0.0
      %1235 = vmatpush.msra.mxu0 0.0
      %1236 = vmatpush.msra.mxu0 0.0
      %1237 = vmatpush.msra.mxu0 0.0
      %1238 = vmatpush.msra.mxu0 0.0
      %1239 = vmatpush.msra.mxu0 %v1151
      %1240 = vmatmul.f32.gmra.mxu0 %v1222
      %v1241 = vpop.f32.mrf.mxu0
      %v1242 = vadd.f32 0.0, %v1241
      %1243 = vdwg.mxu0
      %v1244 = vsel %vm472, %v1173, 0.0
      %v1245 = vsel %vm472, %v1196, 0.0
      %v1246 = vadd.f32 %v1244, %v1245
      %v1247 = vsel %vm472, %v1219, 0.0
      %v1248 = vadd.f32 %v1246, %v1247
      %v1249 = vsel %vm472, %v1242, 0.0
      %v1250 = vadd.f32 %v1248, %v1249
      %s1251 = scalar_lea.vmem %s4, 2
      %v1252 = vld [vmem:[%s1251] sm:$0x1]
      %v1254 = vperm.slane %v1252, 0
      %v1256 = vadd.f32 %v1250, %v1254
      %v1257 = vadd.f32 %v1256, %v509
      %s1258 = scalar_lea.vmem %s4, 3
      %v1259 = vld [vmem:[%s1258] sm:$0x1]
      %s1260 = scalar_lea.vmem %s4, 4
      %v1261 = vld [vmem:[%s1260] sm:$0x1]
      %v1262 = vsel %vm472, %v1257, 0.0
      %1263 = vadd.xlane.f32.xlu0 %v1262
      %v1264 = vpop.xlane.xlu0 %1263
      %v1265 = vmul.f32 %v1264, %v482
      %v1266 = vsub.f32 %v1257, %v1265
      %v1267 = vmul.f32 %v1266, %v1266
      %v1268 = vsel %vm472, %v1267, 0.0
      %1269 = vadd.xlane.f32.xlu0 %v1268
      %v1270 = vpop.xlane.xlu0 %1269
      %v1271 = vmul.f32 %v1270, %v482
      %v1272 = vadd.f32 %v1271, 1e-12
      %v1273 = vrsqrt.pop %v1272
      %v1274 = vmul.f32 %v1273, %v1272
      %v1275 = vmul.f32 %v1274, %v1273
      %v1276 = vmul.f32 0.5, %v1275
      %v1277 = vsub.f32 1.5, %v1276
      %v1278 = vmul.f32 %v1273, %v1277
      %vm1279 = vweird.f32 %v1272
      %vm1280 = vweird.f32 %v1273
      %vm1281 = vmor %vm1279, %vm1280
      %v1282 = vsel %vm1281, %v1273, %v1278
      %v1283 = vmul.f32 %v1266, %v1282
      %v1285 = vperm.slane %v1259, 0
      %v1287 = vmul.f32 %v1283, %v1285
      %v1289 = vperm.slane %v1261, 0
      %v1291 = vadd.f32 %v1287, %v1289
      %v1292 = vld [vmem:[%s8] sm:$0xff]
      %v1293 = vld [vmem:[%s8 + $0x8] sm:$0xff]
      %v1294 = vld [vmem:[%s8 + $0x10] sm:$0xff]
      %v1295 = vld [vmem:[%s8 + $0x18] sm:$0xff]
      %v1296 = vld [vmem:[%s9] sm:$0x1]
      %v1298 = vperm.slane %v1296, 0
      %v1301 = vsel %vm472, %v1291, 0
      %1303 = vmatpush.msra.mxu0 0.0
      %1304 = vmatpush.msra.mxu0 0.0
      %1305 = vmatpush.msra.mxu0 0.0
      %1306 = vmatpush.msra.mxu0 0.0
      %1307 = vmatpush.msra.mxu0 0.0
      %1308 = vmatpush.msra.mxu0 0.0
      %1309 = vmatpush.msra.mxu0 0.0
      %1310 = vmatpush.msra.mxu0 0.0
      %1311 = vmatpush.msra.mxu0 0.0
      %1312 = vmatpush.msra.mxu0 0.0
      %1313 = vmatpush.msra.mxu0 0.0
      %1314 = vmatpush.msra.mxu0 0.0
      %1315 = vmatpush.msra.mxu0 %v1295
      %1316 = vmatpush.msra.mxu0 %v1294
      %1317 = vmatpush.msra.mxu0 %v1293
      %1318 = vmatpush.msra.mxu0 %v1292
      %1319 = vmatmul.f32.gmra.mxu0 %v1301
      %v1320 = vpop.f32.mrf.mxu0
      %v1321 = vadd.f32 %v1298, %v1320
      %1322 = vdwg.mxu0
      %v1323 = vmul.f32 %v1321, 0.5
      %v1324 = vmul.f32 %v1321, 0.044715
      %v1325 = vmul.f32 %v1324, %v1321
      %v1326 = vmul.f32 %v1325, %v1321
      %v1327 = vadd.f32 %v1321, %v1326
      %v1328 = vmul.f32 %v1327, 0.7978846
      %v1329 = vtanh.pop %v1328
      %v1330 = vadd.f32 %v1329, 1.0
      %v1331 = vmul.f32 %v1323, %v1330
      %v1332 = vld [vmem:[%s10] sm:$0xff]
      %v1333 = vld [vmem:[%s10 + $0x8] sm:$0xff]
      %v1334 = vld [vmem:[%s10 + $0x10] sm:$0xff]
      %v1335 = vld [vmem:[%s10 + $0x18] sm:$0xff]
      %v1336 = vld [vmem:[%s10 + $0x20] sm:$0xff]
      %v1337 = vld [vmem:[%s10 + $0x28] sm:$0xff]
      %v1338 = vld [vmem:[%s10 + $0x30] sm:$0xff]
      %v1339 = vld [vmem:[%s10 + $0x38] sm:$0xff]
      %s1340 = scalar_lea.vmem %s4, 5
      %v1341 = vld [vmem:[%s1340] sm:$0x1]
      %v1343 = vperm.slane %v1341, 0
      %vm1345 = vcmask 523264
      %v1347 = vsel %vm1345, %v1331, 0
      %1349 = vmatpush.msra.mxu0 0.0
      %1350 = vmatpush.msra.mxu0 0.0
      %1351 = vmatpush.msra.mxu0 0.0
      %1352 = vmatpush.msra.mxu0 0.0
      %1353 = vmatpush.msra.mxu0 0.0
      %1354 = vmatpush.msra.mxu0 0.0
      %1355 = vmatpush.msra.mxu0 0.0
      %1356 = vmatpush.msra.mxu0 0.0
      %1357 = vmatpush.msra.mxu0 %v1339
      %1358 = vmatpush.msra.mxu0 %v1338
      %1359 = vmatpush.msra.mxu0 %v1337
      %1360 = vmatpush.msra.mxu0 %v1336
      %1361 = vmatpush.msra.mxu0 %v1335
      %1362 = vmatpush.msra.mxu0 %v1334
      %1363 = vmatpush.msra.mxu0 %v1333
      %1364 = vmatpush.msra.mxu0 %v1332
      %1365 = vmatmul.f32.gmra.mxu0 %v1347
      %v1366 = vpop.f32.mrf.mxu0
      %v1367 = vadd.f32 %v1343, %v1366
      %1368 = vdwg.mxu0
      %v1369 = vadd.f32 %v1367, %v1291
      %s1370 = scalar_lea.vmem %s4, 6
      %v1371 = vld [vmem:[%s1370] sm:$0x1]
      %s1372 = scalar_lea.vmem %s4, 7
      %v1373 = vld [vmem:[%s1372] sm:$0x1]
      %v1374 = vsel %vm472, %v1369, 0.0
      %1375 = vadd.xlane.f32.xlu0 %v1374
      %v1376 = vpop.xlane.xlu0 %1375
      %v1377 = vmul.f32 %v1376, %v482
      %v1378 = vsub.f32 %v1369, %v1377
      %v1379 = vmul.f32 %v1378, %v1378
      %v1380 = vsel %vm472, %v1379, 0.0
      %1381 = vadd.xlane.f32.xlu0 %v1380
      %v1382 = vpop.xlane.xlu0 %1381
      %v1383 = vmul.f32 %v1382, %v482
      %v1384 = vadd.f32 %v1383, 1e-12
      %v1385 = vrsqrt.pop %v1384
      %v1386 = vmul.f32 %v1385, %v1384
      %v1387 = vmul.f32 %v1386, %v1385
      %v1388 = vmul.f32 0.5, %v1387
      %v1389 = vsub.f32 1.5, %v1388
      %v1390 = vmul.f32 %v1385, %v1389
      %vm1391 = vweird.f32 %v1384
      %vm1392 = vweird.f32 %v1385
      %vm1393 = vmor %vm1391, %vm1392
      %v1394 = vsel %vm1393, %v1385, %v1390
      %v1395 = vmul.f32 %v1378, %v1394
      %v1397 = vperm.slane %v1371, 0
      %v1399 = vmul.f32 %v1395, %v1397
      %v1401 = vperm.slane %v1373, 0
      %v1403 = vadd.f32 %v1399, %v1401
      %s1404 = scalar_lea.vmem %s5, 384
      %v1405 = vld [vmem:[%s1404] sm:$0xff]
      %v1406 = vld [vmem:[%s1404 + $0x8] sm:$0xff]
      %v1407 = vld [vmem:[%s1404 + $0x10] sm:$0xff]
      %v1408 = vld [vmem:[%s1404 + $0x18] sm:$0xff]
      %v1409 = vld [vmem:[%s1404 + $0x20] sm:$0xff]
      %v1410 = vld [vmem:[%s1404 + $0x28] sm:$0xff]
      %v1411 = vld [vmem:[%s1404 + $0x30] sm:$0xff]
      %v1412 = vld [vmem:[%s1404 + $0x38] sm:$0xff]
      %v1413 = vld [vmem:[%s1404 + $0x40] sm:$0xff]
      %v1414 = vld [vmem:[%s1404 + $0x48] sm:$0xff]
      %v1415 = vld [vmem:[%s1404 + $0x50] sm:$0xff]
      %v1416 = vld [vmem:[%s1404 + $0x58] sm:$0xff]
      %v1417 = vld [vmem:[%s1404 + $0x60] sm:$0xff]
      %v1418 = vld [vmem:[%s1404 + $0x68] sm:$0xff]
      %v1419 = vld [vmem:[%s1404 + $0x70] sm:$0xff]
      %v1420 = vld [vmem:[%s1404 + $0x78] sm:$0xff]
      %v1421 = vld [vmem:[%s1404 + $0x80] sm:$0xff]
      %v1422 = vld [vmem:[%s1404 + $0x88] sm:$0xff]
      %v1423 = vld [vmem:[%s1404 + $0x90] sm:$0xff]
      %v1424 = vld [vmem:[%s1404 + $0x98] sm:$0xff]
      %v1425 = vld [vmem:[%s1404 + $0xa0] sm:$0xff]
      %v1426 = vld [vmem:[%s1404 + $0xa8] sm:$0xff]
      %v1427 = vld [vmem:[%s1404 + $0xb0] sm:$0xff]
      %v1428 = vld [vmem:[%s1404 + $0xb8] sm:$0xff]
      %v1429 = vld [vmem:[%s1404 + $0xc0] sm:$0xff]
      %v1430 = vld [vmem:[%s1404 + $0xc8] sm:$0xff]
      %v1431 = vld [vmem:[%s1404 + $0xd0] sm:$0xff]
      %v1432 = vld [vmem:[%s1404 + $0xd8] sm:$0xff]
      %v1433 = vld [vmem:[%s1404 + $0xe0] sm:$0xff]
      %v1434 = vld [vmem:[%s1404 + $0xe8] sm:$0xff]
      %v1435 = vld [vmem:[%s1404 + $0xf0] sm:$0xff]
      %v1436 = vld [vmem:[%s1404 + $0xf8] sm:$0xff]
      %v1437 = vld [vmem:[%s1404 + $0x100] sm:$0xff]
      %v1438 = vld [vmem:[%s1404 + $0x108] sm:$0xff]
      %v1439 = vld [vmem:[%s1404 + $0x110] sm:$0xff]
      %v1440 = vld [vmem:[%s1404 + $0x118] sm:$0xff]
      %v1441 = vld [vmem:[%s1404 + $0x120] sm:$0xff]
      %v1442 = vld [vmem:[%s1404 + $0x128] sm:$0xff]
      %v1443 = vld [vmem:[%s1404 + $0x130] sm:$0xff]
      %v1444 = vld [vmem:[%s1404 + $0x138] sm:$0xff]
      %v1445 = vld [vmem:[%s1404 + $0x140] sm:$0xff]
      %v1446 = vld [vmem:[%s1404 + $0x148] sm:$0xff]
      %v1447 = vld [vmem:[%s1404 + $0x150] sm:$0xff]
      %v1448 = vld [vmem:[%s1404 + $0x158] sm:$0xff]
      %v1449 = vld [vmem:[%s1404 + $0x160] sm:$0xff]
      %v1450 = vld [vmem:[%s1404 + $0x168] sm:$0xff]
      %v1451 = vld [vmem:[%s1404 + $0x170] sm:$0xff]
      %v1452 = vld [vmem:[%s1404 + $0x178] sm:$0xff]
      %s1453 = scalar_lea.vmem %s6, 12
      %v1454 = vld [vmem:[%s1453] sm:$0x1]
      %v1455 = vld [vmem:[%s1453 + $0x1] sm:$0x1]
      %v1456 = vld [vmem:[%s1453 + $0x2] sm:$0x1]
      %v1457 = vld [vmem:[%s1453 + $0x3] sm:$0x1]
      %v1458 = vld [vmem:[%s1453 + $0x4] sm:$0x1]
      %v1459 = vld [vmem:[%s1453 + $0x5] sm:$0x1]
      %v1460 = vld [vmem:[%s1453 + $0x6] sm:$0x1]
      %v1461 = vld [vmem:[%s1453 + $0x7] sm:$0x1]
      %v1462 = vld [vmem:[%s1453 + $0x8] sm:$0x1]
      %v1463 = vld [vmem:[%s1453 + $0x9] sm:$0x1]
      %v1464 = vld [vmem:[%s1453 + $0xa] sm:$0x1]
      %v1465 = vld [vmem:[%s1453 + $0xb] sm:$0x1]
      %v1478 = vperm.slane %v1454, 0
      %v1479 = vperm.slane %v1455, 0
      %v1480 = vperm.slane %v1456, 0
      %v1481 = vperm.slane %v1457, 0
      %v1482 = vperm.slane %v1458, 0
      %v1483 = vperm.slane %v1459, 0
      %v1484 = vperm.slane %v1460, 0
      %v1485 = vperm.slane %v1461, 0
      %v1486 = vperm.slane %v1462, 0
      %v1487 = vperm.slane %v1463, 0
      %v1488 = vperm.slane %v1464, 0
      %v1489 = vperm.slane %v1465, 0
      %v1503 = vsel %vm472, %v1403, 0
      %1505 = vmatpush.msra.mxu0 0.0
      %1506 = vmatpush.msra.mxu0 0.0
      %1507 = vmatpush.msra.mxu0 0.0
      %1508 = vmatpush.msra.mxu0 0.0
      %1509 = vmatpush.msra.mxu0 0.0
      %1510 = vmatpush.msra.mxu0 0.0
      %1511 = vmatpush.msra.mxu0 0.0
      %1512 = vmatpush.msra.mxu0 0.0
      %1513 = vmatpush.msra.mxu0 0.0
      %1514 = vmatpush.msra.mxu0 0.0
      %1515 = vmatpush.msra.mxu0 0.0
      %1516 = vmatpush.msra.mxu0 0.0
      %1517 = vmatpush.msra.mxu0 %v1408
      %1518 = vmatpush.msra.mxu0 %v1407
      %1519 = vmatpush.msra.mxu0 %v1406
      %1520 = vmatpush.msra.mxu0 %v1405
      %1521 = vmatmul.f32.gmra.mxu0 %v1503
      %v1522 = vpop.f32.mrf.mxu0
      %v1523 = vadd.f32 %v1478, %v1522
      %1524 = vdwg.mxu0
      %1525 = vmatpush.msra.mxu0 0.0
      %1526 = vmatpush.msra.mxu0 0.0
      %1527 = vmatpush.msra.mxu0 0.0
      %1528 = vmatpush.msra.mxu0 0.0
      %1529 = vmatpush.msra.mxu0 0.0
      %1530 = vmatpush.msra.mxu0 0.0
      %1531 = vmatpush.msra.mxu0 0.0
      %1532 = vmatpush.msra.mxu0 0.0
      %1533 = vmatpush.msra.mxu0 0.0
      %1534 = vmatpush.msra.mxu0 0.0
      %1535 = vmatpush.msra.mxu0 0.0
      %1536 = vmatpush.msra.mxu0 0.0
      %1537 = vmatpush.msra.mxu0 %v1412
      %1538 = vmatpush.msra.mxu0 %v1411
      %1539 = vmatpush.msra.mxu0 %v1410
      %1540 = vmatpush.msra.mxu0 %v1409
      %1541 = vmatmul.f32.gmra.mxu0 %v1503
      %v1542 = vpop.f32.mrf.mxu0
      %v1543 = vadd.f32 %v1479, %v1542
      %1544 = vdwg.mxu0
      %1545 = vmatpush.msra.mxu0 0.0
      %1546 = vmatpush.msra.mxu0 0.0
      %1547 = vmatpush.msra.mxu0 0.0
      %1548 = vmatpush.msra.mxu0 0.0
      %1549 = vmatpush.msra.mxu0 0.0
      %1550 = vmatpush.msra.mxu0 0.0
      %1551 = vmatpush.msra.mxu0 0.0
      %1552 = vmatpush.msra.mxu0 0.0
      %1553 = vmatpush.msra.mxu0 0.0
      %1554 = vmatpush.msra.mxu0 0.0
      %1555 = vmatpush.msra.mxu0 0.0
      %1556 = vmatpush.msra.mxu0 0.0
      %1557 = vmatpush.msra.mxu0 %v1416
      %1558 = vmatpush.msra.mxu0 %v1415
      %1559 = vmatpush.msra.mxu0 %v1414
      %1560 = vmatpush.msra.mxu0 %v1413
      %1561 = vmatmul.f32.gmra.mxu0 %v1503
      %v1562 = vpop.f32.mrf.mxu0
      %v1563 = vadd.f32 %v1480, %v1562
      %1564 = vdwg.mxu0
      %1565 = vmatpush.msra.mxu0 0.0
      %1566 = vmatpush.msra.mxu0 0.0
      %1567 = vmatpush.msra.mxu0 0.0
      %1568 = vmatpush.msra.mxu0 0.0
      %1569 = vmatpush.msra.mxu0 0.0
      %1570 = vmatpush.msra.mxu0 0.0
      %1571 = vmatpush.msra.mxu0 0.0
      %1572 = vmatpush.msra.mxu0 0.0
      %1573 = vmatpush.msra.mxu0 0.0
      %1574 = vmatpush.msra.mxu0 0.0
      %1575 = vmatpush.msra.mxu0 0.0
      %1576 = vmatpush.msra.mxu0 0.0
      %1577 = vmatpush.msra.mxu0 %v1420
      %1578 = vmatpush.msra.mxu0 %v1419
      %1579 = vmatpush.msra.mxu0 %v1418
      %1580 = vmatpush.msra.mxu0 %v1417
      %1581 = vmatmul.f32.gmra.mxu0 %v1503
      %v1582 = vpop.f32.mrf.mxu0
      %v1583 = vadd.f32 %v1481, %v1582
      %1584 = vdwg.mxu0
      %1585 = vmatpush.msra.mxu0 0.0
      %1586 = vmatpush.msra.mxu0 0.0
      %1587 = vmatpush.msra.mxu0 0.0
      %1588 = vmatpush.msra.mxu0 0.0
      %1589 = vmatpush.msra.mxu0 0.0
      %1590 = vmatpush.msra.mxu0 0.0
      %1591 = vmatpush.msra.mxu0 0.0
      %1592 = vmatpush.msra.mxu0 0.0
      %1593 = vmatpush.msra.mxu0 0.0
      %1594 = vmatpush.msra.mxu0 0.0
      %1595 = vmatpush.msra.mxu0 0.0
      %1596 = vmatpush.msra.mxu0 0.0
      %1597 = vmatpush.msra.mxu0 %v1424
      %1598 = vmatpush.msra.mxu0 %v1423
      %1599 = vmatpush.msra.mxu0 %v1422
      %1600 = vmatpush.msra.mxu0 %v1421
      %1601 = vmatmul.f32.gmra.mxu0 %v1503
      %v1602 = vpop.f32.mrf.mxu0
      %v1603 = vadd.f32 %v1482, %v1602
      %1604 = vdwg.mxu0
      %1605 = vmatpush.msra.mxu0 0.0
      %1606 = vmatpush.msra.mxu0 0.0
      %1607 = vmatpush.msra.mxu0 0.0
      %1608 = vmatpush.msra.mxu0 0.0
      %1609 = vmatpush.msra.mxu0 0.0
      %1610 = vmatpush.msra.mxu0 0.0
      %1611 = vmatpush.msra.mxu0 0.0
      %1612 = vmatpush.msra.mxu0 0.0
      %1613 = vmatpush.msra.mxu0 0.0
      %1614 = vmatpush.msra.mxu0 0.0
      %1615 = vmatpush.msra.mxu0 0.0
      %1616 = vmatpush.msra.mxu0 0.0
      %1617 = vmatpush.msra.mxu0 %v1428
      %1618 = vmatpush.msra.mxu0 %v1427
      %1619 = vmatpush.msra.mxu0 %v1426
      %1620 = vmatpush.msra.mxu0 %v1425
      %1621 = vmatmul.f32.gmra.mxu0 %v1503
      %v1622 = vpop.f32.mrf.mxu0
      %v1623 = vadd.f32 %v1483, %v1622
      %1624 = vdwg.mxu0
      %1625 = vmatpush.msra.mxu0 0.0
      %1626 = vmatpush.msra.mxu0 0.0
      %1627 = vmatpush.msra.mxu0 0.0
      %1628 = vmatpush.msra.mxu0 0.0
      %1629 = vmatpush.msra.mxu0 0.0
      %1630 = vmatpush.msra.mxu0 0.0
      %1631 = vmatpush.msra.mxu0 0.0
      %1632 = vmatpush.msra.mxu0 0.0
      %1633 = vmatpush.msra.mxu0 0.0
      %1634 = vmatpush.msra.mxu0 0.0
      %1635 = vmatpush.msra.mxu0 0.0
      %1636 = vmatpush.msra.mxu0 0.0
      %1637 = vmatpush.msra.mxu0 %v1432
      %1638 = vmatpush.msra.mxu0 %v1431
      %1639 = vmatpush.msra.mxu0 %v1430
      %1640 = vmatpush.msra.mxu0 %v1429
      %1641 = vmatmul.f32.gmra.mxu0 %v1503
      %v1642 = vpop.f32.mrf.mxu0
      %v1643 = vadd.f32 %v1484, %v1642
      %1644 = vdwg.mxu0
      %1645 = vmatpush.msra.mxu0 0.0
      %1646 = vmatpush.msra.mxu0 0.0
      %1647 = vmatpush.msra.mxu0 0.0
      %1648 = vmatpush.msra.mxu0 0.0
      %1649 = vmatpush.msra.mxu0 0.0
      %1650 = vmatpush.msra.mxu0 0.0
      %1651 = vmatpush.msra.mxu0 0.0
      %1652 = vmatpush.msra.mxu0 0.0
      %1653 = vmatpush.msra.mxu0 0.0
      %1654 = vmatpush.msra.mxu0 0.0
      %1655 = vmatpush.msra.mxu0 0.0
      %1656 = vmatpush.msra.mxu0 0.0
      %1657 = vmatpush.msra.mxu0 %v1436
      %1658 = vmatpush.msra.mxu0 %v1435
      %1659 = vmatpush.msra.mxu0 %v1434
      %1660 = vmatpush.msra.mxu0 %v1433
      %1661 = vmatmul.f32.gmra.mxu0 %v1503
      %v1662 = vpop.f32.mrf.mxu0
      %v1663 = vadd.f32 %v1485, %v1662
      %1664 = vdwg.mxu0
      %1665 = vmatpush.msra.mxu0 0.0
      %1666 = vmatpush.msra.mxu0 0.0
      %1667 = vmatpush.msra.mxu0 0.0
      %1668 = vmatpush.msra.mxu0 0.0
      %1669 = vmatpush.msra.mxu0 0.0
      %1670 = vmatpush.msra.mxu0 0.0
      %1671 = vmatpush.msra.mxu0 0.0
      %1672 = vmatpush.msra.mxu0 0.0
      %1673 = vmatpush.msra.mxu0 0.0
      %1674 = vmatpush.msra.mxu0 0.0
      %1675 = vmatpush.msra.mxu0 0.0
      %1676 = vmatpush.msra.mxu0 0.0
      %1677 = vmatpush.msra.mxu0 %v1440
      %1678 = vmatpush.msra.mxu0 %v1439
      %1679 = vmatpush.msra.mxu0 %v1438
      %1680 = vmatpush.msra.mxu0 %v1437
      %1681 = vmatmul.f32.gmra.mxu0 %v1503
      %v1682 = vpop.f32.mrf.mxu0
      %v1683 = vadd.f32 %v1486, %v1682
      %1684 = vdwg.mxu0
      %1685 = vmatpush.msra.mxu0 0.0
      %1686 = vmatpush.msra.mxu0 0.0
      %1687 = vmatpush.msra.mxu0 0.0
      %1688 = vmatpush.msra.mxu0 0.0
      %1689 = vmatpush.msra.mxu0 0.0
      %1690 = vmatpush.msra.mxu0 0.0
      %1691 = vmatpush.msra.mxu0 0.0
      %1692 = vmatpush.msra.mxu0 0.0
      %1693 = vmatpush.msra.mxu0 0.0
      %1694 = vmatpush.msra.mxu0 0.0
      %1695 = vmatpush.msra.mxu0 0.0
      %1696 = vmatpush.msra.mxu0 0.0
      %1697 = vmatpush.msra.mxu0 %v1444
      %1698 = vmatpush.msra.mxu0 %v1443
      %1699 = vmatpush.msra.mxu0 %v1442
      %1700 = vmatpush.msra.mxu0 %v1441
      %1701 = vmatmul.f32.gmra.mxu0 %v1503
      %v1702 = vpop.f32.mrf.mxu0
      %v1703 = vadd.f32 %v1487, %v1702
      %1704 = vdwg.mxu0
      %1705 = vmatpush.msra.mxu0 0.0
      %1706 = vmatpush.msra.mxu0 0.0
      %1707 = vmatpush.msra.mxu0 0.0
      %1708 = vmatpush.msra.mxu0 0.0
      %1709 = vmatpush.msra.mxu0 0.0
      %1710 = vmatpush.msra.mxu0 0.0
      %1711 = vmatpush.msra.mxu0 0.0
      %1712 = vmatpush.msra.mxu0 0.0
      %1713 = vmatpush.msra.mxu0 0.0
      %1714 = vmatpush.msra.mxu0 0.0
      %1715 = vmatpush.msra.mxu0 0.0
      %1716 = vmatpush.msra.mxu0 0.0
      %1717 = vmatpush.msra.mxu0 %v1448
      %1718 = vmatpush.msra.mxu0 %v1447
      %1719 = vmatpush.msra.mxu0 %v1446
      %1720 = vmatpush.msra.mxu0 %v1445
      %1721 = vmatmul.f32.gmra.mxu0 %v1503
      %v1722 = vpop.f32.mrf.mxu0
      %v1723 = vadd.f32 %v1488, %v1722
      %1724 = vdwg.mxu0
      %1725 = vmatpush.msra.mxu0 0.0
      %1726 = vmatpush.msra.mxu0 0.0
      %1727 = vmatpush.msra.mxu0 0.0
      %1728 = vmatpush.msra.mxu0 0.0
      %1729 = vmatpush.msra.mxu0 0.0
      %1730 = vmatpush.msra.mxu0 0.0
      %1731 = vmatpush.msra.mxu0 0.0
      %1732 = vmatpush.msra.mxu0 0.0
      %1733 = vmatpush.msra.mxu0 0.0
      %1734 = vmatpush.msra.mxu0 0.0
      %1735 = vmatpush.msra.mxu0 0.0
      %1736 = vmatpush.msra.mxu0 0.0
      %1737 = vmatpush.msra.mxu0 %v1452
      %1738 = vmatpush.msra.mxu0 %v1451
      %1739 = vmatpush.msra.mxu0 %v1450
      %1740 = vmatpush.msra.mxu0 %v1449
      %1741 = vmatmul.f32.gmra.mxu0 %v1503
      %v1742 = vpop.f32.mrf.mxu0
      %v1743 = vadd.f32 %v1489, %v1742
      %1744 = vdwg.mxu0
      %v1746 = vsel %vm855, %v1523, 0
      %v1749 = vsel %vm855, %v1603, 0
      %1751 = vmatpush.xpose.msra.mxu0 0.0
      %1752 = vmatpush.xpose.msra.mxu0 0.0
      %1753 = vmatpush.xpose.msra.mxu0 0.0
      %1754 = vmatpush.xpose.msra.mxu0 0.0
      %1755 = vmatpush.xpose.msra.mxu0 0.0
      %1756 = vmatpush.xpose.msra.mxu0 0.0
      %1757 = vmatpush.xpose.msra.mxu0 0.0
      %1758 = vmatpush.xpose.msra.mxu0 0.0
      %1759 = vmatpush.xpose.msra.mxu0 0.0
      %1760 = vmatpush.xpose.msra.mxu0 0.0
      %1761 = vmatpush.xpose.msra.mxu0 0.0
      %1762 = vmatpush.xpose.msra.mxu0 0.0
      %1763 = vmatpush.xpose.msra.mxu0 0.0
      %1764 = vmatpush.xpose.msra.mxu0 0.0
      %1765 = vmatpush.xpose.msra.mxu0 0.0
      %1766 = vmatpush.xpose.msra.mxu0 %v1749
      %1767 = vmatmul.f32.gmra.mxu0 %v1746
      %v1768 = vpop.f32.mrf.mxu0
      %v1769 = vadd.f32 %v853, %v1768
      %1770 = vdwg.mxu0
      %v1772 = vsel %vm855, %v1543, 0
      %v1775 = vsel %vm855, %v1623, 0
      %1777 = vmatpush.xpose.msra.mxu0 0.0
      %1778 = vmatpush.xpose.msra.mxu0 0.0
      %1779 = vmatpush.xpose.msra.mxu0 0.0
      %1780 = vmatpush.xpose.msra.mxu0 0.0
      %1781 = vmatpush.xpose.msra.mxu0 0.0
      %1782 = vmatpush.xpose.msra.mxu0 0.0
      %1783 = vmatpush.xpose.msra.mxu0 0.0
      %1784 = vmatpush.xpose.msra.mxu0 0.0
      %1785 = vmatpush.xpose.msra.mxu0 0.0
      %1786 = vmatpush.xpose.msra.mxu0 0.0
      %1787 = vmatpush.xpose.msra.mxu0 0.0
      %1788 = vmatpush.xpose.msra.mxu0 0.0
      %1789 = vmatpush.xpose.msra.mxu0 0.0
      %1790 = vmatpush.xpose.msra.mxu0 0.0
      %1791 = vmatpush.xpose.msra.mxu0 0.0
      %1792 = vmatpush.xpose.msra.mxu0 %v1775
      %1793 = vmatmul.f32.gmra.mxu0 %v1772
      %v1794 = vpop.f32.mrf.mxu0
      %v1795 = vadd.f32 %v853, %v1794
      %1796 = vdwg.mxu0
      %v1798 = vsel %vm855, %v1563, 0
      %v1801 = vsel %vm855, %v1643, 0
      %1803 = vmatpush.xpose.msra.mxu0 0.0
      %1804 = vmatpush.xpose.msra.mxu0 0.0
      %1805 = vmatpush.xpose.msra.mxu0 0.0
      %1806 = vmatpush.xpose.msra.mxu0 0.0
      %1807 = vmatpush.xpose.msra.mxu0 0.0
      %1808 = vmatpush.xpose.msra.mxu0 0.0
      %1809 = vmatpush.xpose.msra.mxu0 0.0
      %1810 = vmatpush.xpose.msra.mxu0 0.0
      %1811 = vmatpush.xpose.msra.mxu0 0.0
      %1812 = vmatpush.xpose.msra.mxu0 0.0
      %1813 = vmatpush.xpose.msra.mxu0 0.0
      %1814 = vmatpush.xpose.msra.mxu0 0.0
      %1815 = vmatpush.xpose.msra.mxu0 0.0
      %1816 = vmatpush.xpose.msra.mxu0 0.0
      %1817 = vmatpush.xpose.msra.mxu0 0.0
      %1818 = vmatpush.xpose.msra.mxu0 %v1801
      %1819 = vmatmul.f32.gmra.mxu0 %v1798
      %v1820 = vpop.f32.mrf.mxu0
      %v1821 = vadd.f32 %v853, %v1820
      %1822 = vdwg.mxu0
      %v1824 = vsel %vm855, %v1583, 0
      %v1827 = vsel %vm855, %v1663, 0
      %1829 = vmatpush.xpose.msra.mxu0 0.0
      %1830 = vmatpush.xpose.msra.mxu0 0.0
      %1831 = vmatpush.xpose.msra.mxu0 0.0
      %1832 = vmatpush.xpose.msra.mxu0 0.0
      %1833 = vmatpush.xpose.msra.mxu0 0.0
      %1834 = vmatpush.xpose.msra.mxu0 0.0
      %1835 = vmatpush.xpose.msra.mxu0 0.0
      %1836 = vmatpush.xpose.msra.mxu0 0.0
      %1837 = vmatpush.xpose.msra.mxu0 0.0
      %1838 = vmatpush.xpose.msra.mxu0 0.0
      %1839 = vmatpush.xpose.msra.mxu0 0.0
      %1840 = vmatpush.xpose.msra.mxu0 0.0
      %1841 = vmatpush.xpose.msra.mxu0 0.0
      %1842 = vmatpush.xpose.msra.mxu0 0.0
      %1843 = vmatpush.xpose.msra.mxu0 0.0
      %1844 = vmatpush.xpose.msra.mxu0 %v1827
      %1845 = vmatmul.f32.gmra.mxu0 %v1824
      %v1846 = vpop.f32.mrf.mxu0
      %v1847 = vadd.f32 %v853, %v1846
      %1848 = vdwg.mxu0
      %v1849 = vsel %vm855, %v1769, -inf
      %1850 = vmax.xlane.f32.xlu0 %v1849
      %v1851 = vpop.xlane.xlu0 %1850
      %v1852 = vsel %vm855, %v1795, -inf
      %1853 = vmax.xlane.f32.xlu0 %v1852
      %v1854 = vpop.xlane.xlu0 %1853
      %v1855 = vsel %vm855, %v1821, -inf
      %1856 = vmax.xlane.f32.xlu0 %v1855
      %v1857 = vpop.xlane.xlu0 %1856
      %v1858 = vsel %vm855, %v1847, -inf
      %1859 = vmax.xlane.f32.xlu0 %v1858
      %v1860 = vpop.xlane.xlu0 %1859
      %v1861 = vsub.f32 %v1769, %v1851
      %v1862 = vsub.f32 %v1795, %v1854
      %v1863 = vsub.f32 %v1821, %v1857
      %v1864 = vsub.f32 %v1847, %v1860
      %v1865 = vmul.f32 %v1861, 1.442695
      %v1866 = vpow.pop %v1865
      %v1867 = vmul.f32 %v1862, 1.442695
      %v1868 = vpow.pop %v1867
      %v1869 = vmul.f32 %v1863, 1.442695
      %v1870 = vpow.pop %v1869
      %v1871 = vmul.f32 %v1864, 1.442695
      %v1872 = vpow.pop %v1871
      %v1873 = vsel %vm855, %v1866, 0.0
      %1874 = vadd.xlane.f32.xlu0 %v1873
      %v1875 = vpop.xlane.xlu0 %1874
      %v1876 = vsel %vm855, %v1868, 0.0
      %1877 = vadd.xlane.f32.xlu0 %v1876
      %v1878 = vpop.xlane.xlu0 %1877
      %v1879 = vsel %vm855, %v1870, 0.0
      %1880 = vadd.xlane.f32.xlu0 %v1879
      %v1881 = vpop.xlane.xlu0 %1880
      %v1882 = vsel %vm855, %v1872, 0.0
      %1883 = vadd.xlane.f32.xlu0 %v1882
      %v1884 = vpop.xlane.xlu0 %1883
      %v1885 = vrcp.pop %v1875
      %v1886 = vmul.f32 %v1875, %v1885
      %v1887 = vsub.f32 1.0, %v1886
      %v1888 = vmul.f32 %v1885, %v1887
      %v1889 = vadd.f32 %v1885, %v1888
      %vm1890 = vweird.f32 %v1875
      %vm1891 = vweird.f32 %v1885
      %vm1892 = vmor %vm1890, %vm1891
      %v1893 = vsel %vm1892, %v1885, %v1889
      %v1894 = vand.u32 2147483647, %v1875
      %vm1895 = vcmp.eq.f32.partialorder %v1894, 8.507059e+37
      %v1896 = vand.u32 %v1875, 2147483648
      %v1897 = vor.u32 1.1754944e-38, %v1896
      %v1898 = vsel %vm1895, %v1897, %v1893
      %v1899 = vmul.f32 %v1866, %v1898
      %v1900 = vrcp.pop %v1878
      %v1901 = vmul.f32 %v1878, %v1900
      %v1902 = vsub.f32 1.0, %v1901
      %v1903 = vmul.f32 %v1900, %v1902
      %v1904 = vadd.f32 %v1900, %v1903
      %vm1905 = vweird.f32 %v1878
      %vm1906 = vweird.f32 %v1900
      %vm1907 = vmor %vm1905, %vm1906
      %v1908 = vsel %vm1907, %v1900, %v1904
      %v1909 = vand.u32 2147483647, %v1878
      %vm1910 = vcmp.eq.f32.partialorder %v1909, 8.507059e+37
      %v1911 = vand.u32 %v1878, 2147483648
      %v1912 = vor.u32 1.1754944e-38, %v1911
      %v1913 = vsel %vm1910, %v1912, %v1908
      %v1914 = vmul.f32 %v1868, %v1913
      %v1915 = vrcp.pop %v1881
      %v1916 = vmul.f32 %v1881, %v1915
      %v1917 = vsub.f32 1.0, %v1916
      %v1918 = vmul.f32 %v1915, %v1917
      %v1919 = vadd.f32 %v1915, %v1918
      %vm1920 = vweird.f32 %v1881
      %vm1921 = vweird.f32 %v1915
      %vm1922 = vmor %vm1920, %vm1921
      %v1923 = vsel %vm1922, %v1915, %v1919
      %v1924 = vand.u32 2147483647, %v1881
      %vm1925 = vcmp.eq.f32.partialorder %v1924, 8.507059e+37
      %v1926 = vand.u32 %v1881, 2147483648
      %v1927 = vor.u32 1.1754944e-38, %v1926
      %v1928 = vsel %vm1925, %v1927, %v1923
      %v1929 = vmul.f32 %v1870, %v1928
      %v1930 = vrcp.pop %v1884
      %v1931 = vmul.f32 %v1884, %v1930
      %v1932 = vsub.f32 1.0, %v1931
      %v1933 = vmul.f32 %v1930, %v1932
      %v1934 = vadd.f32 %v1930, %v1933
      %vm1935 = vweird.f32 %v1884
      %vm1936 = vweird.f32 %v1930
      %vm1937 = vmor %vm1935, %vm1936
      %v1938 = vsel %vm1937, %v1930, %v1934
      %v1939 = vand.u32 2147483647, %v1884
      %vm1940 = vcmp.eq.f32.partialorder %v1939, 8.507059e+37
      %v1941 = vand.u32 %v1884, 2147483648
      %v1942 = vor.u32 1.1754944e-38, %v1941
      %v1943 = vsel %vm1940, %v1942, %v1938
      %v1944 = vmul.f32 %v1872, %v1943
      %v1946 = vsel %vm855, %v1899, 0
      %1948 = vmatpush.msra.mxu0 0.0
      %1949 = vmatpush.msra.mxu0 0.0
      %1950 = vmatpush.msra.mxu0 0.0
      %1951 = vmatpush.msra.mxu0 0.0
      %1952 = vmatpush.msra.mxu0 0.0
      %1953 = vmatpush.msra.mxu0 0.0
      %1954 = vmatpush.msra.mxu0 0.0
      %1955 = vmatpush.msra.mxu0 0.0
      %1956 = vmatpush.msra.mxu0 0.0
      %1957 = vmatpush.msra.mxu0 0.0
      %1958 = vmatpush.msra.mxu0 0.0
      %1959 = vmatpush.msra.mxu0 0.0
      %1960 = vmatpush.msra.mxu0 0.0
      %1961 = vmatpush.msra.mxu0 0.0
      %1962 = vmatpush.msra.mxu0 0.0
      %1963 = vmatpush.msra.mxu0 %v1683
      %1964 = vmatmul.f32.gmra.mxu0 %v1946
      %v1965 = vpop.f32.mrf.mxu0
      %v1966 = vadd.f32 0.0, %v1965
      %1967 = vdwg.mxu0
      %v1969 = vsel %vm855, %v1914, 0
      %1971 = vmatpush.msra.mxu0 0.0
      %1972 = vmatpush.msra.mxu0 0.0
      %1973 = vmatpush.msra.mxu0 0.0
      %1974 = vmatpush.msra.mxu0 0.0
      %1975 = vmatpush.msra.mxu0 0.0
      %1976 = vmatpush.msra.mxu0 0.0
      %1977 = vmatpush.msra.mxu0 0.0
      %1978 = vmatpush.msra.mxu0 0.0
      %1979 = vmatpush.msra.mxu0 0.0
      %1980 = vmatpush.msra.mxu0 0.0
      %1981 = vmatpush.msra.mxu0 0.0
      %1982 = vmatpush.msra.mxu0 0.0
      %1983 = vmatpush.msra.mxu0 0.0
      %1984 = vmatpush.msra.mxu0 0.0
      %1985 = vmatpush.msra.mxu0 0.0
      %1986 = vmatpush.msra.mxu0 %v1703
      %1987 = vmatmul.f32.gmra.mxu0 %v1969
      %v1988 = vpop.f32.mrf.mxu0
      %v1989 = vadd.f32 0.0, %v1988
      %1990 = vdwg.mxu0
      %v1992 = vsel %vm855, %v1929, 0
      %1994 = vmatpush.msra.mxu0 0.0
      %1995 = vmatpush.msra.mxu0 0.0
      %1996 = vmatpush.msra.mxu0 0.0
      %1997 = vmatpush.msra.mxu0 0.0
      %1998 = vmatpush.msra.mxu0 0.0
      %1999 = vmatpush.msra.mxu0 0.0
      %2000 = vmatpush.msra.mxu0 0.0
      %2001 = vmatpush.msra.mxu0 0.0
      %2002 = vmatpush.msra.mxu0 0.0
      %2003 = vmatpush.msra.mxu0 0.0
      %2004 = vmatpush.msra.mxu0 0.0
      %2005 = vmatpush.msra.mxu0 0.0
      %2006 = vmatpush.msra.mxu0 0.0
      %2007 = vmatpush.msra.mxu0 0.0
      %2008 = vmatpush.msra.mxu0 0.0
      %2009 = vmatpush.msra.mxu0 %v1723
      %2010 = vmatmul.f32.gmra.mxu0 %v1992
      %v2011 = vpop.f32.mrf.mxu0
      %v2012 = vadd.f32 0.0, %v2011
      %2013 = vdwg.mxu0
      %v2015 = vsel %vm855, %v1944, 0
      %2017 = vmatpush.msra.mxu0 0.0
      %2018 = vmatpush.msra.mxu0 0.0
      %2019 = vmatpush.msra.mxu0 0.0
      %2020 = vmatpush.msra.mxu0 0.0
      %2021 = vmatpush.msra.mxu0 0.0
      %2022 = vmatpush.msra.mxu0 0.0
      %2023 = vmatpush.msra.mxu0 0.0
      %2024 = vmatpush.msra.mxu0 0.0
      %2025 = vmatpush.msra.mxu0 0.0
      %2026 = vmatpush.msra.mxu0 0.0
      %2027 = vmatpush.msra.mxu0 0.0
      %2028 = vmatpush.msra.mxu0 0.0
      %2029 = vmatpush.msra.mxu0 0.0
      %2030 = vmatpush.msra.mxu0 0.0
      %2031 = vmatpush.msra.mxu0 0.0
      %2032 = vmatpush.msra.mxu0 %v1743
      %2033 = vmatmul.f32.gmra.mxu0 %v2015
      %v2034 = vpop.f32.mrf.mxu0
      %v2035 = vadd.f32 0.0, %v2034
      %2036 = vdwg.mxu0
      %s2037 = scalar_lea.vmem %s7, 32
      %v2038 = vld [vmem:[%s2037] sm:$0xff]
      %v2039 = vld [vmem:[%s2037 + $0x8] sm:$0xff]
      %v2040 = vld [vmem:[%s2037 + $0x10] sm:$0xff]
      %v2041 = vld [vmem:[%s2037 + $0x18] sm:$0xff]
      %v2043 = vsel %vm855, %v1966, 0
      %2045 = vmatpush.msra.mxu0 0.0
      %2046 = vmatpush.msra.mxu0 0.0
      %2047 = vmatpush.msra.mxu0 0.0
      %2048 = vmatpush.msra.mxu0 0.0
      %2049 = vmatpush.msra.mxu0 0.0
      %2050 = vmatpush.msra.mxu0 0.0
      %2051 = vmatpush.msra.mxu0 0.0
      %2052 = vmatpush.msra.mxu0 0.0
      %2053 = vmatpush.msra.mxu0 0.0
      %2054 = vmatpush.msra.mxu0 0.0
      %2055 = vmatpush.msra.mxu0 0.0
      %2056 = vmatpush.msra.mxu0 0.0
      %2057 = vmatpush.msra.mxu0 0.0
      %2058 = vmatpush.msra.mxu0 0.0
      %2059 = vmatpush.msra.mxu0 0.0
      %2060 = vmatpush.msra.mxu0 %v2038
      %2061 = vmatmul.f32.gmra.mxu0 %v2043
      %v2062 = vpop.f32.mrf.mxu0
      %v2063 = vadd.f32 0.0, %v2062
      %2064 = vdwg.mxu0
      %v2066 = vsel %vm855, %v1989, 0
      %2068 = vmatpush.msra.mxu0 0.0
      %2069 = vmatpush.msra.mxu0 0.0
      %2070 = vmatpush.msra.mxu0 0.0
      %2071 = vmatpush.msra.mxu0 0.0
      %2072 = vmatpush.msra.mxu0 0.0
      %2073 = vmatpush.msra.mxu0 0.0
      %2074 = vmatpush.msra.mxu0 0.0
      %2075 = vmatpush.msra.mxu0 0.0
      %2076 = vmatpush.msra.mxu0 0.0
      %2077 = vmatpush.msra.mxu0 0.0
      %2078 = vmatpush.msra.mxu0 0.0
      %2079 = vmatpush.msra.mxu0 0.0
      %2080 = vmatpush.msra.mxu0 0.0
      %2081 = vmatpush.msra.mxu0 0.0
      %2082 = vmatpush.msra.mxu0 0.0
      %2083 = vmatpush.msra.mxu0 %v2039
      %2084 = vmatmul.f32.gmra.mxu0 %v2066
      %v2085 = vpop.f32.mrf.mxu0
      %v2086 = vadd.f32 0.0, %v2085
      %2087 = vdwg.mxu0
      %v2089 = vsel %vm855, %v2012, 0
      %2091 = vmatpush.msra.mxu0 0.0
      %2092 = vmatpush.msra.mxu0 0.0
      %2093 = vmatpush.msra.mxu0 0.0
      %2094 = vmatpush.msra.mxu0 0.0
      %2095 = vmatpush.msra.mxu0 0.0
      %2096 = vmatpush.msra.mxu0 0.0
      %2097 = vmatpush.msra.mxu0 0.0
      %2098 = vmatpush.msra.mxu0 0.0
      %2099 = vmatpush.msra.mxu0 0.0
      %2100 = vmatpush.msra.mxu0 0.0
      %2101 = vmatpush.msra.mxu0 0.0
      %2102 = vmatpush.msra.mxu0 0.0
      %2103 = vmatpush.msra.mxu0 0.0
      %2104 = vmatpush.msra.mxu0 0.0
      %2105 = vmatpush.msra.mxu0 0.0
      %2106 = vmatpush.msra.mxu0 %v2040
      %2107 = vmatmul.f32.gmra.mxu0 %v2089
      %v2108 = vpop.f32.mrf.mxu0
      %v2109 = vadd.f32 0.0, %v2108
      %2110 = vdwg.mxu0
      %v2112 = vsel %vm855, %v2035, 0
      %2114 = vmatpush.msra.mxu0 0.0
      %2115 = vmatpush.msra.mxu0 0.0
      %2116 = vmatpush.msra.mxu0 0.0
      %2117 = vmatpush.msra.mxu0 0.0
      %2118 = vmatpush.msra.mxu0 0.0
      %2119 = vmatpush.msra.mxu0 0.0
      %2120 = vmatpush.msra.mxu0 0.0
      %2121 = vmatpush.msra.mxu0 0.0
      %2122 = vmatpush.msra.mxu0 0.0
      %2123 = vmatpush.msra.mxu0 0.0
      %2124 = vmatpush.msra.mxu0 0.0
      %2125 = vmatpush.msra.mxu0 0.0
      %2126 = vmatpush.msra.mxu0 0.0
      %2127 = vmatpush.msra.mxu0 0.0
      %2128 = vmatpush.msra.mxu0 0.0
      %2129 = vmatpush.msra.mxu0 %v2041
      %2130 = vmatmul.f32.gmra.mxu0 %v2112
      %v2131 = vpop.f32.mrf.mxu0
      %v2132 = vadd.f32 0.0, %v2131
      %2133 = vdwg.mxu0
      %v2134 = vsel %vm472, %v2063, 0.0
      %v2135 = vsel %vm472, %v2086, 0.0
      %v2136 = vadd.f32 %v2134, %v2135
      %v2137 = vsel %vm472, %v2109, 0.0
      %v2138 = vadd.f32 %v2136, %v2137
      %v2139 = vsel %vm472, %v2132, 0.0
      %v2140 = vadd.f32 %v2138, %v2139
      %s2141 = scalar_lea.vmem %s4, 8
      %v2142 = vld [vmem:[%s2141] sm:$0x1]
      %v2144 = vperm.slane %v2142, 0
      %v2146 = vadd.f32 %v2140, %v2144
      %v2147 = vadd.f32 %v2146, %v1403
      %s2148 = scalar_lea.vmem %s4, 9
      %v2149 = vld [vmem:[%s2148] sm:$0x1]
      %s2150 = scalar_lea.vmem %s4, 10
      %v2151 = vld [vmem:[%s2150] sm:$0x1]
      %v2152 = vsel %vm472, %v2147, 0.0
      %2153 = vadd.xlane.f32.xlu0 %v2152
      %v2154 = vpop.xlane.xlu0 %2153
      %v2155 = vmul.f32 %v2154, %v482
      %v2156 = vsub.f32 %v2147, %v2155
      %v2157 = vmul.f32 %v2156, %v2156
      %v2158 = vsel %vm472, %v2157, 0.0
      %2159 = vadd.xlane.f32.xlu0 %v2158
      %v2160 = vpop.xlane.xlu0 %2159
      %v2161 = vmul.f32 %v2160, %v482
      %v2162 = vadd.f32 %v2161, 1e-12
      %v2163 = vrsqrt.pop %v2162
      %v2164 = vmul.f32 %v2163, %v2162
      %v2165 = vmul.f32 %v2164, %v2163
      %v2166 = vmul.f32 0.5, %v2165
      %v2167 = vsub.f32 1.5, %v2166
      %v2168 = vmul.f32 %v2163, %v2167
      %vm2169 = vweird.f32 %v2162
      %vm2170 = vweird.f32 %v2163
      %vm2171 = vmor %vm2169, %vm2170
      %v2172 = vsel %vm2171, %v2163, %v2168
      %v2173 = vmul.f32 %v2156, %v2172
      %v2175 = vperm.slane %v2149, 0
      %v2177 = vmul.f32 %v2173, %v2175
      %v2179 = vperm.slane %v2151, 0
      %v2181 = vadd.f32 %v2177, %v2179
      %s2182 = scalar_lea.vmem %s8, 32
      %v2183 = vld [vmem:[%s2182] sm:$0xff]
      %v2184 = vld [vmem:[%s2182 + $0x8] sm:$0xff]
      %v2185 = vld [vmem:[%s2182 + $0x10] sm:$0xff]
      %v2186 = vld [vmem:[%s2182 + $0x18] sm:$0xff]
      %s2187 = scalar_lea.vmem %s9, 1
      %v2188 = vld [vmem:[%s2187] sm:$0x1]
      %v2190 = vperm.slane %v2188, 0
      %v2193 = vsel %vm472, %v2181, 0
      %2195 = vmatpush.msra.mxu0 0.0
      %2196 = vmatpush.msra.mxu0 0.0
      %2197 = vmatpush.msra.mxu0 0.0
      %2198 = vmatpush.msra.mxu0 0.0
      %2199 = vmatpush.msra.mxu0 0.0
      %2200 = vmatpush.msra.mxu0 0.0
      %2201 = vmatpush.msra.mxu0 0.0
      %2202 = vmatpush.msra.mxu0 0.0
      %2203 = vmatpush.msra.mxu0 0.0
      %2204 = vmatpush.msra.mxu0 0.0
      %2205 = vmatpush.msra.mxu0 0.0
      %2206 = vmatpush.msra.mxu0 0.0
      %2207 = vmatpush.msra.mxu0 %v2186
      %2208 = vmatpush.msra.mxu0 %v2185
      %2209 = vmatpush.msra.mxu0 %v2184
      %2210 = vmatpush.msra.mxu0 %v2183
      %2211 = vmatmul.f32.gmra.mxu0 %v2193
      %v2212 = vpop.f32.mrf.mxu0
      %v2213 = vadd.f32 %v2190, %v2212
      %2214 = vdwg.mxu0
      %v2215 = vmul.f32 %v2213, 0.5
      %v2216 = vmul.f32 %v2213, 0.044715
      %v2217 = vmul.f32 %v2216, %v2213
      %v2218 = vmul.f32 %v2217, %v2213
      %v2219 = vadd.f32 %v2213, %v2218
      %v2220 = vmul.f32 %v2219, 0.7978846
      %v2221 = vtanh.pop %v2220
      %v2222 = vadd.f32 %v2221, 1.0
      %v2223 = vmul.f32 %v2215, %v2222
      %s2224 = scalar_lea.vmem %s10, 64
      %v2225 = vld [vmem:[%s2224] sm:$0xff]
      %v2226 = vld [vmem:[%s2224 + $0x8] sm:$0xff]
      %v2227 = vld [vmem:[%s2224 + $0x10] sm:$0xff]
      %v2228 = vld [vmem:[%s2224 + $0x18] sm:$0xff]
      %v2229 = vld [vmem:[%s2224 + $0x20] sm:$0xff]
      %v2230 = vld [vmem:[%s2224 + $0x28] sm:$0xff]
      %v2231 = vld [vmem:[%s2224 + $0x30] sm:$0xff]
      %v2232 = vld [vmem:[%s2224 + $0x38] sm:$0xff]
      %s2233 = scalar_lea.vmem %s4, 11
      %v2234 = vld [vmem:[%s2233] sm:$0x1]
      %v2236 = vperm.slane %v2234, 0
      %v2239 = vsel %vm1345, %v2223, 0
      %2241 = vmatpush.msra.mxu0 0.0
      %2242 = vmatpush.msra.mxu0 0.0
      %2243 = vmatpush.msra.mxu0 0.0
      %2244 = vmatpush.msra.mxu0 0.0
      %2245 = vmatpush.msra.mxu0 0.0
      %2246 = vmatpush.msra.mxu0 0.0
      %2247 = vmatpush.msra.mxu0 0.0
      %2248 = vmatpush.msra.mxu0 0.0
      %2249 = vmatpush.msra.mxu0 %v2232
      %2250 = vmatpush.msra.mxu0 %v2231
      %2251 = vmatpush.msra.mxu0 %v2230
      %2252 = vmatpush.msra.mxu0 %v2229
      %2253 = vmatpush.msra.mxu0 %v2228
      %2254 = vmatpush.msra.mxu0 %v2227
      %2255 = vmatpush.msra.mxu0 %v2226
      %2256 = vmatpush.msra.mxu0 %v2225
      %2257 = vmatmul.f32.gmra.mxu0 %v2239
      %v2258 = vpop.f32.mrf.mxu0
      %v2259 = vadd.f32 %v2236, %v2258
      %2260 = vdwg.mxu0
      %v2261 = vadd.f32 %v2259, %v2181
      %s2262 = scalar_lea.vmem %s4, 12
      %v2263 = vld [vmem:[%s2262] sm:$0x1]
      %s2264 = scalar_lea.vmem %s4, 13
      %v2265 = vld [vmem:[%s2264] sm:$0x1]
      %v2266 = vsel %vm472, %v2261, 0.0
      %2267 = vadd.xlane.f32.xlu0 %v2266
      %v2268 = vpop.xlane.xlu0 %2267
      %v2269 = vmul.f32 %v2268, %v482
      %v2270 = vsub.f32 %v2261, %v2269
      %v2271 = vmul.f32 %v2270, %v2270
      %v2272 = vsel %vm472, %v2271, 0.0
      %2273 = vadd.xlane.f32.xlu0 %v2272
      %v2274 = vpop.xlane.xlu0 %2273
      %v2275 = vmul.f32 %v2274, %v482
      %v2276 = vadd.f32 %v2275, 1e-12
      %v2277 = vrsqrt.pop %v2276
      %v2278 = vmul.f32 %v2277, %v2276
      %v2279 = vmul.f32 %v2278, %v2277
      %v2280 = vmul.f32 0.5, %v2279
      %v2281 = vsub.f32 1.5, %v2280
      %v2282 = vmul.f32 %v2277, %v2281
      %vm2283 = vweird.f32 %v2276
      %vm2284 = vweird.f32 %v2277
      %vm2285 = vmor %vm2283, %vm2284
      %v2286 = vsel %vm2285, %v2277, %v2282
      %v2287 = vmul.f32 %v2270, %v2286
      %v2289 = vperm.slane %v2263, 0
      %v2291 = vmul.f32 %v2287, %v2289
      %v2293 = vperm.slane %v2265, 0
      %v2295 = vadd.f32 %v2291, %v2293
      %v2296 = vld [vmem:[%s11] sm:$0xff]
      %v2297 = vld [vmem:[%s11 + $0x8] sm:$0xff]
      %v2298 = vld [vmem:[%s11 + $0x10] sm:$0xff]
      %v2299 = vld [vmem:[%s11 + $0x18] sm:$0xff]
      %v2300 = vld [vmem:[%s11 + $0x20] sm:$0x1]
      %v2301 = vperm.slane %v2300, 0
      %v2303 = vsel %vm472, %v2295, 0
      %2305 = vmatpush.msra.mxu0 0.0
      %2306 = vmatpush.msra.mxu0 0.0
      %2307 = vmatpush.msra.mxu0 0.0
      %2308 = vmatpush.msra.mxu0 0.0
      %2309 = vmatpush.msra.mxu0 0.0
      %2310 = vmatpush.msra.mxu0 0.0
      %2311 = vmatpush.msra.mxu0 0.0
      %2312 = vmatpush.msra.mxu0 0.0
      %2313 = vmatpush.msra.mxu0 0.0
      %2314 = vmatpush.msra.mxu0 0.0
      %2315 = vmatpush.msra.mxu0 0.0
      %2316 = vmatpush.msra.mxu0 0.0
      %2317 = vmatpush.msra.mxu0 %v2299
      %2318 = vmatpush.msra.mxu0 %v2298
      %2319 = vmatpush.msra.mxu0 %v2297
      %2320 = vmatpush.msra.mxu0 %v2296
      %2321 = vmatmul.f32.gmra.mxu0 %v2303
      %v2322 = vpop.f32.mrf.mxu0
      %v2323 = vadd.f32 %v2301, %v2322
      %2324 = vdwg.mxu0
      %vm2325 = vcmask 39936
      %2326 = vst.msk [vmem:[%s422] sm:$0xff] %vm2325, %v2323
      %p2327 = scmp.lt.s32.totalorder %s23, 1
      %s2328 = scalar_select %p2327, %s23, 1
      %s2329 = smul.addr %s2328, 8
      %s2330 = scalar_lea.vmem %s12, %s2329
      // Predicated region
      $region69: #{bert_token_classifier_forward.1} parent=67 // pred_check
        %p2331 = pneg %p303
      $region70: #{bert_token_classifier_forward.1} parent=67 // pred_check_branch
        %2333 = sbr.rel (%p2331) target = $region72
      $region71: #{bert_token_classifier_forward.1} parent=67 // pred_region
        _
      $region72: #{bert_token_classifier_forward.1} parent=67 // pred_fallthru
        _
    $region68: #{bert_token_classifier_forward.1} parent=5 // pred_fallthru
      _
    %p2334 = scmp.le.s32.totalorder 2, %s18
    // Predicated region
    $region73: #{bert_token_classifier_forward.1} parent=5 // pred_check
      %p2335 = pneg %p2334
    $region74: #{bert_token_classifier_forward.1} parent=5 // pred_check_branch
      %2337 = sbr.rel (%p2335) target = $region76
    $region75: #{bert_token_classifier_forward.1} parent=5 // pred_region
      %s2338 = ssub.s32 %s18, 2
      // Predicated region
      $region77: #{bert_token_classifier_forward.1} parent=75 // pred_check
        %p2339 = pneg %p309
      $region78: #{bert_token_classifier_forward.1} parent=75 // pred_check_branch
        %2341 = sbr.rel (%p2339) target = $region80
      $region79: #{bert_token_classifier_forward.1} parent=75 // pred_region
        %p2342 = scmp.lt.s32.totalorder %s24, 1
        %s2343 = scalar_select %p2342, %s24, 1
        %s2344 = smul.addr %s2343, 8
        %s2345 = scalar_lea.vmem %s12, %s2344
      $region80: #{bert_token_classifier_forward.1} parent=75 // pred_fallthru
        _
    $region76: #{bert_token_classifier_forward.1} parent=5 // pred_fallthru
      _
  $region6: #{bert_token_classifier_forward.1} parent=0 // loop_footer
    %s22 = sadd.s32 1, %s18
  $region7: #{bert_token_classifier_forward.1} parent=0 // loop_footer_branch
    %17 = sbr.rel target = $region3
  $region8: #{bert_token_classifier_forward.1} parent=0 // loop_exit
    _

</llo_original>
